<compile_context>
chip_gen: v7x
topology: tpu7x:2x2x1
jax: 0.10.0
libtpu: 0.0.40
codegen_flags: <defaults>
</compile_context>

<pallas_src>
import functools

import jax
import jax.numpy as jnp
import numpy as np
from jax.experimental import pallas as pl
from jax.experimental.pallas import tpu as pltpu


# ----------------------------------------------------------------------------
# LSTM layer kernel: single program, whole layer (all time steps, both directions)
# resident in VMEM.  Combined-direction weight layout (built in init_params):
#   w_ih_c: (In, 4*D*H)   columns = gate-major blocks [i|f|g|o], each D*H wide,
#                          inside each block direction d occupies lanes [d*H,(d+1)*H)
#   w_hh_c: (D*H, 4*D*H)  block-diagonal per direction (cross-direction blocks = 0)
#   b_c   : (1, 4*D*H)    b_ih + b_hh in the same column layout
# Output is (B, T, D*H) with direction d occupying columns [d*H, (d+1)*H).
# ----------------------------------------------------------------------------
def lstm_layer_kernel(x_ref, wih_ref, whh_ref, b_ref, out_ref, *, D, H):
    B, T, In = x_ref.shape
    DH = D * H
    G = 4 * DH

    x_flat = x_ref[...].reshape(B * T, In).astype(jnp.float32)          # (B*T, In)

    # Hoisted input projection for all time steps of BOTH directions: one matmul.
    xw = (jnp.dot(x_flat, wih_ref[...].astype(jnp.float32),
                  preferred_element_type=jnp.float32)
          + b_ref[...].astype(jnp.float32)).reshape(B, T, G)            # (B, T, 4DH)

    # Lane masks (hoisted out of the serial loop):
    #  * g-gate lanes [2DH, 3DH) get tanh, everything else sigmoid (one full-vreg select)
    #  * backward-direction lanes (upper H of each DH-wide gate block) read reversed time
    lane = jax.lax.broadcasted_iota(jnp.int32, (B, G), 1)
    is_g_gate = (lane >= 2 * DH) & (lane < 3 * DH)
    is_bwd = (lane % DH) >= H

    whh = whh_ref[...].astype(jnp.float32)                              # (DH, 4DH)

    hc = jnp.zeros((B, DH), jnp.float32)                                # [h_fwd | h_bwd]
    cc = jnp.zeros((B, DH), jnp.float32)
    hs = []
    for t in range(T):                                                  # fully unrolled, static
        if D == 2:
            # fwd direction consumes time t, bwd direction consumes time T-1-t
            g_in = jnp.where(is_bwd, xw[:, T - 1 - t, :], xw[:, t, :])
        else:
            g_in = xw[:, t, :]
        gates = g_in + jnp.dot(hc, whh, preferred_element_type=jnp.float32)   # (B, 4DH)
        act = jnp.where(is_g_gate, jnp.tanh(gates), jax.nn.sigmoid(gates))
        i = act[:, 0 * DH:1 * DH]
        f = act[:, 1 * DH:2 * DH]
        g = act[:, 2 * DH:3 * DH]
        o = act[:, 3 * DH:4 * DH]
        cc = f * cc + i * g
        hc = o * jnp.tanh(cc)
        hs.append(hc)

    # One batched output store.  Forward columns [0,H) are in step(=time) order;
    # backward columns [H,2H) were produced in reversed time order -> select the
    # step-reversed stack for those lanes.
    out_full = jnp.stack(hs, axis=1)                                    # (B, T, DH)
    if D == 2:
        out_rev = jnp.stack(hs[::-1], axis=1)                           # (B, T, DH)
        lane3 = jax.lax.broadcasted_iota(jnp.int32, (B, T, DH), 2)
        out_full = jnp.where(lane3 < H, out_full, out_rev)
    out_ref[...] = out_full.astype(out_ref.dtype)


def run_lstm_layer(x, w_ih_c, w_hh_c, b_c, *, num_directions):
    """x: (B, T, In) batch-major.  Returns (B, T, D*H)."""
    B, T, _ = x.shape
    DH = w_hh_c.shape[0]
    kern = functools.partial(lstm_layer_kernel, D=num_directions,
                             H=DH // num_directions)
    return pl.pallas_call(
        kern,
        out_shape=jax.ShapeDtypeStruct((B, T, DH), x.dtype),
        in_specs=[pl.BlockSpec(memory_space=pltpu.MemorySpace.VMEM)
                  for _ in range(4)],
        out_specs=pl.BlockSpec(memory_space=pltpu.MemorySpace.VMEM),
    )(x, w_ih_c, w_hh_c, b_c)


# ----------------------------------------------------------------------------
# Self-attention + final FC kernel: single program, batched across B.
#   scores = W2(tanh(W1(rnn_out)))  (one matmul pair over the flattened (B*T) rows)
#   attn   = softmax over time
#   out    = fc(flatten_r( attn^T @ rnn_out ))
# fc weight is pre-reshaped to (r, Dh, O) so the flattened-(r*Dh) FC is a short
# static sum of r batched (B, Dh) @ (Dh, O) matmuls (no lane reshape of the context).
# ----------------------------------------------------------------------------
def attn_fc_kernel(rnn_ref, w1_ref, w2_ref, wfc_ref, bfc_ref, out_ref, attn_ref):
    B, T, Dh = rnn_ref.shape
    r = w2_ref.shape[1]

    rnn = rnn_ref[...].astype(jnp.float32)                              # (B, T, Dh)
    flat = rnn.reshape(B * T, Dh)
    s1 = jnp.tanh(jnp.dot(flat, w1_ref[...],
                          preferred_element_type=jnp.float32))          # (B*T, da)
    scores = jnp.dot(s1, w2_ref[...],
                     preferred_element_type=jnp.float32)                # (B*T, r)
    scores = scores.reshape(B, T, r)

    # softmax over time (dim=1), batched over B and r; denominator on the EUP
    m = jnp.max(scores, axis=1, keepdims=True)                          # (B, 1, r)
    e = jnp.exp(scores - m)
    inv = pl.reciprocal(jnp.sum(e, axis=1, keepdims=True), approx=True)
    attn = e * inv                                                      # (B, T, r)
    attn_ref[...] = attn.astype(attn_ref.dtype)                         # one batched store

    # context row j: sum_t attn[:, t, j] * rnn[:, t, :]  -> (B, Dh); FC accumulated
    # over the r static slots (matches fc(ctx.view(B, r*Dh)) with row-major flatten).
    y = bfc_ref[...].astype(jnp.float32)                                # (1, O) -> broadcasts
    for j in range(r):
        ctx_j = jnp.sum(attn[:, :, j:j + 1] * rnn, axis=1)              # (B, Dh)
        y = y + jnp.dot(ctx_j, wfc_ref[j],
                        preferred_element_type=jnp.float32)             # (B, O)
    out_ref[...] = y.astype(out_ref.dtype)                              # one batched store


def run_attn_fc(rnn_out, w1_t, w2_t, wfc3, bfc):
    B, T, _ = rnn_out.shape
    r = w2_t.shape[1]
    O = wfc3.shape[-1]
    return pl.pallas_call(
        attn_fc_kernel,
        out_shape=(jax.ShapeDtypeStruct((B, O), rnn_out.dtype),
                   jax.ShapeDtypeStruct((B, T, r), rnn_out.dtype)),
        in_specs=[pl.BlockSpec(memory_space=pltpu.MemorySpace.VMEM)
                  for _ in range(5)],
        out_specs=(pl.BlockSpec(memory_space=pltpu.MemorySpace.VMEM),
                   pl.BlockSpec(memory_space=pltpu.MemorySpace.VMEM)),
    )(rnn_out, w1_t, w2_t, wfc3, bfc)


# ----------------------------------------------------------------------------
# Full module forward (thin wrapper: one pallas_call per LSTM layer + one for attn/fc;
# no host-side transposes, reversals or concatenates).
# ----------------------------------------------------------------------------
def self_attn_series_lstm_forward(x, params, *, num_layers, bidirectional):
    D = 2 if bidirectional else 1
    layer_in = x                                                        # (B, T, In)
    for layer in range(num_layers):
        p = params["lstm"][layer]
        layer_in = run_lstm_layer(layer_in, p["w_ih_c"], p["w_hh_c"], p["b_c"],
                                  num_directions=D)
    rnn_out = layer_in                                                  # (B, T, D*H)
    out, attn_w = run_attn_fc(rnn_out, params["w1_t"], params["w2_t"],
                              params["wfc3"], params["bfc"])
    return out, attn_w


# ----------------------------------------------------------------------------
# Deterministic parameter init (PyTorch-style uniform(-1/sqrt(H), 1/sqrt(H))).
# Builds (a) the combined gate-major / block-diagonal layout used by the kernel and
# (b) the plain per-direction transposed weights used by the pure-JAX reference.
# ----------------------------------------------------------------------------
def init_params(key, *, input_size, hidden_size, num_layers, bidirectional,
                dim_w1, dim_w2, output_size, dtype=jnp.float32):
    D = 2 if bidirectional else 1
    H = hidden_size
    DH = D * H
    params = {"lstm": []}

    def unif(k, shape, bound):
        return jax.random.uniform(k, shape, dtype, -bound, bound)

    k_lstm = 1.0 / np.sqrt(H)
    keys = jax.random.split(key, num_layers * D * 4 + 4)
    ki = 0
    for layer in range(num_layers):
        in_l = input_size if layer == 0 else DH
        w_ih_c = jnp.zeros((in_l, 4 * DH), dtype)
        w_hh_c = jnp.zeros((DH, 4 * DH), dtype)
        b_c = jnp.zeros((1, 4 * DH), dtype)
        ref_wih, ref_whh, ref_b = [], [], []
        for d in range(D):
            w_ih = unif(keys[ki], (4 * H, in_l), k_lstm); ki += 1       # PyTorch layout
            w_hh = unif(keys[ki], (4 * H, H), k_lstm); ki += 1
            b_ih = unif(keys[ki], (4 * H,), k_lstm); ki += 1
            b_hh = unif(keys[ki], (4 * H,), k_lstm); ki += 1
            w_ih_t = jnp.transpose(w_ih)                                # (In, 4H) cols [i|f|g|o]
            w_hh_t = jnp.transpose(w_hh)                                # (H, 4H)
            bsum = b_ih + b_hh
            ref_wih.append(w_ih_t); ref_whh.append(w_hh_t); ref_b.append(bsum[None, :])
            for k in range(4):                                          # gate k: i,f,g,o
                col = slice(k * DH + d * H, k * DH + (d + 1) * H)
                w_ih_c = w_ih_c.at[:, col].set(w_ih_t[:, k * H:(k + 1) * H])
                w_hh_c = w_hh_c.at[d * H:(d + 1) * H, col].set(
                    w_hh_t[:, k * H:(k + 1) * H])
                b_c = b_c.at[0, col].set(bsum[k * H:(k + 1) * H])
        params["lstm"].append({
            "w_ih_c": w_ih_c,                                           # (In, 4DH)
            "w_hh_c": w_hh_c,                                           # (DH, 4DH)
            "b_c": b_c,                                                 # (1, 4DH)
            "ref": {"w_ih_t": jnp.stack(ref_wih),                       # (D, In, 4H)
                    "w_hh_t": jnp.stack(ref_whh),                       # (D, H, 4H)
                    "b": jnp.stack(ref_b)},                             # (D, 1, 4H)
        })

    w1 = unif(keys[ki], (dim_w1, DH), 1.0 / np.sqrt(DH)); ki += 1       # Linear(Dh, da)
    w2 = unif(keys[ki], (dim_w2, dim_w1), 1.0 / np.sqrt(dim_w1)); ki += 1
    wfc = unif(keys[ki], (output_size, dim_w2 * DH),
               1.0 / np.sqrt(dim_w2 * DH)); ki += 1
    bfc = unif(keys[ki], (output_size,), 1.0 / np.sqrt(dim_w2 * DH)); ki += 1
    params["w1_t"] = jnp.transpose(w1)                                  # (Dh, da)
    params["w2_t"] = jnp.transpose(w2)                                  # (da, r)
    # fc applied to context flattened as (r, Dh) row-major -> reshape W.T to (r, Dh, O)
    params["wfc3"] = jnp.transpose(wfc).reshape(dim_w2, DH, output_size)
    params["bfc"] = bfc[None, :]                                        # (1, O)
    return params


# ----------------------------------------------------------------------------
# Pure-JAX reference (same math, no Pallas) for a sanity check
# ----------------------------------------------------------------------------
def reference_forward(x, params, *, num_layers, bidirectional):
    D = 2 if bidirectional else 1
    layer_in = x
    for layer in range(num_layers):
        p = params["lstm"][layer]["ref"]
        dir_outs = []
        for d in range(D):
            w_ih_t = p["w_ih_t"][d]
            w_hh_t = p["w_hh_t"][d]
            b = p["b"][d]
            seq = layer_in if d == 0 else layer_in[:, ::-1, :]
            B = seq.shape[0]
            H = w_hh_t.shape[0]
            h = jnp.zeros((B, H), jnp.float32)
            c = jnp.zeros((B, H), jnp.float32)
            hs = []
            for t in range(seq.shape[1]):
                g = seq[:, t, :] @ w_ih_t + h @ w_hh_t + b
                i = jax.nn.sigmoid(g[:, 0 * H:1 * H])
                f = jax.nn.sigmoid(g[:, 1 * H:2 * H])
                gg = jnp.tanh(g[:, 2 * H:3 * H])
                o = jax.nn.sigmoid(g[:, 3 * H:4 * H])
                c = f * c + i * gg
                h = o * jnp.tanh(c)
                hs.append(h)
            hseq = jnp.stack(hs, axis=1)
            if d == 1:
                hseq = hseq[:, ::-1, :]
            dir_outs.append(hseq)
        layer_in = jnp.concatenate(dir_outs, axis=-1)
    rnn_out = layer_in
    scores = jnp.tanh(rnn_out @ params["w1_t"]) @ params["w2_t"]        # (B, T, r)
    attn = jax.nn.softmax(scores, axis=1)
    ctx = jnp.einsum("btr,btd->brd", attn, rnn_out)                     # (B, r, Dh)
    r, Dh, O = params["wfc3"].shape
    y = (ctx.reshape(ctx.shape[0], r * Dh) @ params["wfc3"].reshape(r * Dh, O)
         + params["bfc"])
    return y, attn


if __name__ == "__main__":
    # module hyper-parameters (small, consistent with the PyTorch forward)
    input_size = 16
    hidden_size = 32
    num_layers = 1
    bidirectional = True
    dim_w1 = 16          # da
    dim_w2 = 4           # r
    output_size = 8
    batch, seq = 2, 8

    key = jax.random.PRNGKey(0)
    k_param, k_x = jax.random.split(key)
    params = init_params(k_param, input_size=input_size, hidden_size=hidden_size,
                         num_layers=num_layers, bidirectional=bidirectional,
                         dim_w1=dim_w1, dim_w2=dim_w2, output_size=output_size)
    x = jax.random.normal(k_x, (batch, seq, input_size), jnp.float32)

    fwd = functools.partial(self_attn_series_lstm_forward,
                            num_layers=num_layers, bidirectional=bidirectional)
    out, attn_w = jax.jit(fwd)(x, params)
    out = jax.block_until_ready(out)
    attn_w = jax.block_until_ready(attn_w)

    # sanity check against the pure-JAX reference (loose tol: MXU default precision
    # + approx EUP reciprocal in the softmax)
    ref_out, ref_attn = reference_forward(x, params, num_layers=num_layers,
                                          bidirectional=bidirectional)
    assert out.shape == (batch, output_size)
    assert attn_w.shape == (batch, seq, dim_w2)
    np.testing.assert_allclose(np.asarray(out), np.asarray(ref_out),
                               rtol=5e-2, atol=5e-2)
    np.testing.assert_allclose(np.asarray(attn_w), np.asarray(ref_attn),
                               rtol=5e-2, atol=5e-2)
    print("KERNEL_OK")
</pallas_src>

<mosaic_0001>
module attributes {stable_mosaic.version = 11 : i64} {
  func.func @lstm_layer_kernel(%arg0: memref<2x8x16xf32, #tpu.memory_space<vmem>>, %arg1: memref<16x256xf32, #tpu.memory_space<vmem>>, %arg2: memref<64x256xf32, #tpu.memory_space<vmem>>, %arg3: memref<1x256xf32, #tpu.memory_space<vmem>>, %arg4: memref<2x8x64xf32, #tpu.memory_space<vmem>>) attributes {dimension_semantics = [], scalar_prefetch = 0 : i64, scratch_operands = 0 : i64, tpu.core_type = #tpu.core_type<tc>} {
    %c0 = arith.constant 0 : index
    %c0_0 = arith.constant 0 : index
    %c0_1 = arith.constant 0 : index
    %0 = vector.load %arg0[%c0, %c0_0, %c0_1] : memref<2x8x16xf32, #tpu.memory_space<vmem>>, vector<2x8x16xf32>
    %1 = vector.shape_cast %0 : vector<2x8x16xf32> to vector<16x16xf32>
    %c0_2 = arith.constant 0 : index
    %c0_3 = arith.constant 0 : index
    %2 = vector.load %arg1[%c0_2, %c0_3] : memref<16x256xf32, #tpu.memory_space<vmem>>, vector<16x256xf32>
    %cst = arith.constant dense<0.000000e+00> : vector<16x256xf32>
    %3 = tpu.matmul %1, %2, %cst {dimension_numbers = #tpu.dot_dimension_numbers<[1], [0], [0], [1], [0, 0, 1, 1], [], []>} : vector<16x16xf32>, vector<16x256xf32>, vector<16x256xf32> -> vector<16x256xf32>
    %c0_4 = arith.constant 0 : index
    %c0_5 = arith.constant 0 : index
    %4 = vector.load %arg3[%c0_4, %c0_5] : memref<1x256xf32, #tpu.memory_space<vmem>>, vector<1x256xf32>
    %5 = vector.broadcast %4 : vector<1x256xf32> to vector<16x256xf32>
    %6 = arith.addf %3, %5 : vector<16x256xf32>
    %7 = vector.shape_cast %6 : vector<16x256xf32> to vector<2x8x256xf32>
    %8 = tpu.iota {dimensions = array<i32: 1>} : vector<2x256xi32>
    %c128_i32 = arith.constant 128 : i32
    %9 = vector.broadcast %c128_i32 : i32 to vector<2x256xi32>
    %10 = arith.cmpi sge, %8, %9 : vector<2x256xi32>
    %c192_i32 = arith.constant 192 : i32
    %11 = vector.broadcast %c192_i32 : i32 to vector<2x256xi32>
    %12 = arith.cmpi slt, %8, %11 : vector<2x256xi32>
    %13 = arith.andi %10, %12 : vector<2x256xi1>
    %c64_i32 = arith.constant 64 : i32
    %c0_i32 = arith.constant 0 : i32
    %14 = arith.cmpi eq, %c64_i32, %c0_i32 : i32
    %c1_i32 = arith.constant 1 : i32
    %15 = arith.select %14, %c1_i32, %c64_i32 : i32
    %16 = vector.broadcast %15 : i32 to vector<2x256xi32>
    %17 = arith.remsi %8, %16 : vector<2x256xi32>
    %c0_i32_6 = arith.constant 0 : i32
    %18 = vector.broadcast %c0_i32_6 : i32 to vector<2x256xi32>
    %19 = arith.cmpi ne, %17, %18 : vector<2x256xi32>
    %c0_i32_7 = arith.constant 0 : i32
    %20 = vector.broadcast %c0_i32_7 : i32 to vector<2x256xi32>
    %21 = arith.cmpi slt, %17, %20 : vector<2x256xi32>
    %c0_i32_8 = arith.constant 0 : i32
    %22 = arith.cmpi slt, %15, %c0_i32_8 : i32
    %23 = vector.broadcast %22 : i1 to vector<2x256xi1>
    %24 = vector.broadcast %23 : vector<2x256xi1> to vector<2x256xi1>
    %25 = arith.xori %21, %24 : vector<2x256xi1>
    %26 = arith.andi %25, %19 : vector<2x256xi1>
    %27 = vector.broadcast %15 : i32 to vector<2x256xi32>
    %28 = arith.addi %17, %27 : vector<2x256xi32>
    %29 = arith.select %26, %28, %17 : vector<2x256xi1>, vector<2x256xi32>
    %c32_i32 = arith.constant 32 : i32
    %30 = vector.broadcast %c32_i32 : i32 to vector<2x256xi32>
    %31 = arith.cmpi sge, %29, %30 : vector<2x256xi32>
    %c0_9 = arith.constant 0 : index
    %c0_10 = arith.constant 0 : index
    %32 = vector.load %arg2[%c0_9, %c0_10] : memref<64x256xf32, #tpu.memory_space<vmem>>, vector<64x256xf32>
    %cst_11 = arith.constant 0.000000e+00 : f32
    %33 = vector.broadcast %cst_11 : f32 to vector<2x64xf32>
    %cst_12 = arith.constant 0.000000e+00 : f32
    %34 = vector.broadcast %cst_12 : f32 to vector<2x64xf32>
    %35 = vector.extract_strided_slice %7 {offsets = [0, 7, 0], sizes = [2, 1, 256], strides = [1, 1, 1]} : vector<2x8x256xf32> to vector<2x1x256xf32>
    %36 = vector.shape_cast %35 : vector<2x1x256xf32> to vector<2x256xf32>
    %37 = vector.extract_strided_slice %7 {offsets = [0, 0, 0], sizes = [2, 1, 256], strides = [1, 1, 1]} : vector<2x8x256xf32> to vector<2x1x256xf32>
    %38 = vector.shape_cast %37 : vector<2x1x256xf32> to vector<2x256xf32>
    %39 = arith.select %31, %36, %38 : vector<2x256xi1>, vector<2x256xf32>
    %cst_13 = arith.constant dense<0.000000e+00> : vector<2x256xf32>
    %40 = tpu.matmul %33, %32, %cst_13 {dimension_numbers = #tpu.dot_dimension_numbers<[1], [0], [0], [1], [0, 0, 1, 1], [], []>} : vector<2x64xf32>, vector<64x256xf32>, vector<2x256xf32> -> vector<2x256xf32>
    %41 = arith.addf %39, %40 : vector<2x256xf32>
    %42 = math.tanh %41 : vector<2x256xf32>
    %43 = arith.negf %41 : vector<2x256xf32>
    %44 = math.exp %43 : vector<2x256xf32>
    %cst_14 = arith.constant 1.000000e+00 : f32
    %45 = vector.broadcast %cst_14 : f32 to vector<2x256xf32>
    %46 = arith.addf %45, %44 : vector<2x256xf32>
    %47 = arith.divf %45, %46 : vector<2x256xf32>
    %48 = arith.select %13, %42, %47 : vector<2x256xi1>, vector<2x256xf32>
    %49 = vector.extract_strided_slice %48 {offsets = [0, 0], sizes = [2, 64], strides = [1, 1]} : vector<2x256xf32> to vector<2x64xf32>
    %50 = vector.extract_strided_slice %48 {offsets = [0, 64], sizes = [2, 64], strides = [1, 1]} : vector<2x256xf32> to vector<2x64xf32>
    %51 = vector.extract_strided_slice %48 {offsets = [0, 128], sizes = [2, 64], strides = [1, 1]} : vector<2x256xf32> to vector<2x64xf32>
    %52 = vector.extract_strided_slice %48 {offsets = [0, 192], sizes = [2, 64], strides = [1, 1]} : vector<2x256xf32> to vector<2x64xf32>
    %53 = arith.mulf %50, %34 : vector<2x64xf32>
    %54 = arith.mulf %49, %51 : vector<2x64xf32>
    %55 = arith.addf %53, %54 : vector<2x64xf32>
    %56 = math.tanh %55 : vector<2x64xf32>
    %57 = arith.mulf %52, %56 : vector<2x64xf32>
    %58 = vector.extract_strided_slice %7 {offsets = [0, 6, 0], sizes = [2, 1, 256], strides = [1, 1, 1]} : vector<2x8x256xf32> to vector<2x1x256xf32>
    %59 = vector.shape_cast %58 : vector<2x1x256xf32> to vector<2x256xf32>
    %60 = vector.extract_strided_slice %7 {offsets = [0, 1, 0], sizes = [2, 1, 256], strides = [1, 1, 1]} : vector<2x8x256xf32> to vector<2x1x256xf32>
    %61 = vector.shape_cast %60 : vector<2x1x256xf32> to vector<2x256xf32>
    %62 = arith.select %31, %59, %61 : vector<2x256xi1>, vector<2x256xf32>
    %cst_15 = arith.constant dense<0.000000e+00> : vector<2x256xf32>
    %63 = tpu.matmul %57, %32, %cst_15 {dimension_numbers = #tpu.dot_dimension_numbers<[1], [0], [0], [1], [0, 0, 1, 1], [], []>} : vector<2x64xf32>, vector<64x256xf32>, vector<2x256xf32> -> vector<2x256xf32>
    %64 = arith.addf %62, %63 : vector<2x256xf32>
    %65 = math.tanh %64 : vector<2x256xf32>
    %66 = arith.negf %64 : vector<2x256xf32>
    %67 = math.exp %66 : vector<2x256xf32>
    %cst_16 = arith.constant 1.000000e+00 : f32
    %68 = vector.broadcast %cst_16 : f32 to vector<2x256xf32>
    %69 = arith.addf %68, %67 : vector<2x256xf32>
    %70 = arith.divf %68, %69 : vector<2x256xf32>
    %71 = arith.select %13, %65, %70 : vector<2x256xi1>, vector<2x256xf32>
    %72 = vector.extract_strided_slice %71 {offsets = [0, 0], sizes = [2, 64], strides = [1, 1]} : vector<2x256xf32> to vector<2x64xf32>
    %73 = vector.extract_strided_slice %71 {offsets = [0, 64], sizes = [2, 64], strides = [1, 1]} : vector<2x256xf32> to vector<2x64xf32>
    %74 = vector.extract_strided_slice %71 {offsets = [0, 128], sizes = [2, 64], strides = [1, 1]} : vector<2x256xf32> to vector<2x64xf32>
    %75 = vector.extract_strided_slice %71 {offsets = [0, 192], sizes = [2, 64], strides = [1, 1]} : vector<2x256xf32> to vector<2x64xf32>
    %76 = arith.mulf %73, %55 : vector<2x64xf32>
    %77 = arith.mulf %72, %74 : vector<2x64xf32>
    %78 = arith.addf %76, %77 : vector<2x64xf32>
    %79 = math.tanh %78 : vector<2x64xf32>
    %80 = arith.mulf %75, %79 : vector<2x64xf32>
    %81 = vector.extract_strided_slice %7 {offsets = [0, 5, 0], sizes = [2, 1, 256], strides = [1, 1, 1]} : vector<2x8x256xf32> to vector<2x1x256xf32>
    %82 = vector.shape_cast %81 : vector<2x1x256xf32> to vector<2x256xf32>
    %83 = vector.extract_strided_slice %7 {offsets = [0, 2, 0], sizes = [2, 1, 256], strides = [1, 1, 1]} : vector<2x8x256xf32> to vector<2x1x256xf32>
    %84 = vector.shape_cast %83 : vector<2x1x256xf32> to vector<2x256xf32>
    %85 = arith.select %31, %82, %84 : vector<2x256xi1>, vector<2x256xf32>
    %cst_17 = arith.constant dense<0.000000e+00> : vector<2x256xf32>
    %86 = tpu.matmul %80, %32, %cst_17 {dimension_numbers = #tpu.dot_dimension_numbers<[1], [0], [0], [1], [0, 0, 1, 1], [], []>} : vector<2x64xf32>, vector<64x256xf32>, vector<2x256xf32> -> vector<2x256xf32>
    %87 = arith.addf %85, %86 : vector<2x256xf32>
    %88 = math.tanh %87 : vector<2x256xf32>
    %89 = arith.negf %87 : vector<2x256xf32>
    %90 = math.exp %89 : vector<2x256xf32>
    %cst_18 = arith.constant 1.000000e+00 : f32
    %91 = vector.broadcast %cst_18 : f32 to vector<2x256xf32>
    %92 = arith.addf %91, %90 : vector<2x256xf32>
    %93 = arith.divf %91, %92 : vector<2x256xf32>
    %94 = arith.select %13, %88, %93 : vector<2x256xi1>, vector<2x256xf32>
    %95 = vector.extract_strided_slice %94 {offsets = [0, 0], sizes = [2, 64], strides = [1, 1]} : vector<2x256xf32> to vector<2x64xf32>
    %96 = vector.extract_strided_slice %94 {offsets = [0, 64], sizes = [2, 64], strides = [1, 1]} : vector<2x256xf32> to vector<2x64xf32>
    %97 = vector.extract_strided_slice %94 {offsets = [0, 128], sizes = [2, 64], strides = [1, 1]} : vector<2x256xf32> to vector<2x64xf32>
    %98 = vector.extract_strided_slice %94 {offsets = [0, 192], sizes = [2, 64], strides = [1, 1]} : vector<2x256xf32> to vector<2x64xf32>
    %99 = arith.mulf %96, %78 : vector<2x64xf32>
    %100 = arith.mulf %95, %97 : vector<2x64xf32>
    %101 = arith.addf %99, %100 : vector<2x64xf32>
    %102 = math.tanh %101 : vector<2x64xf32>
    %103 = arith.mulf %98, %102 : vector<2x64xf32>
    %104 = vector.extract_strided_slice %7 {offsets = [0, 4, 0], sizes = [2, 1, 256], strides = [1, 1, 1]} : vector<2x8x256xf32> to vector<2x1x256xf32>
    %105 = vector.shape_cast %104 : vector<2x1x256xf32> to vector<2x256xf32>
    %106 = vector.extract_strided_slice %7 {offsets = [0, 3, 0], sizes = [2, 1, 256], strides = [1, 1, 1]} : vector<2x8x256xf32> to vector<2x1x256xf32>
    %107 = vector.shape_cast %106 : vector<2x1x256xf32> to vector<2x256xf32>
    %108 = arith.select %31, %105, %107 : vector<2x256xi1>, vector<2x256xf32>
    %cst_19 = arith.constant dense<0.000000e+00> : vector<2x256xf32>
    %109 = tpu.matmul %103, %32, %cst_19 {dimension_numbers = #tpu.dot_dimension_numbers<[1], [0], [0], [1], [0, 0, 1, 1], [], []>} : vector<2x64xf32>, vector<64x256xf32>, vector<2x256xf32> -> vector<2x256xf32>
    %110 = arith.addf %108, %109 : vector<2x256xf32>
    %111 = math.tanh %110 : vector<2x256xf32>
    %112 = arith.negf %110 : vector<2x256xf32>
    %113 = math.exp %112 : vector<2x256xf32>
    %cst_20 = arith.constant 1.000000e+00 : f32
    %114 = vector.broadcast %cst_20 : f32 to vector<2x256xf32>
    %115 = arith.addf %114, %113 : vector<2x256xf32>
    %116 = arith.divf %114, %115 : vector<2x256xf32>
    %117 = arith.select %13, %111, %116 : vector<2x256xi1>, vector<2x256xf32>
    %118 = vector.extract_strided_slice %117 {offsets = [0, 0], sizes = [2, 64], strides = [1, 1]} : vector<2x256xf32> to vector<2x64xf32>
    %119 = vector.extract_strided_slice %117 {offsets = [0, 64], sizes = [2, 64], strides = [1, 1]} : vector<2x256xf32> to vector<2x64xf32>
    %120 = vector.extract_strided_slice %117 {offsets = [0, 128], sizes = [2, 64], strides = [1, 1]} : vector<2x256xf32> to vector<2x64xf32>
    %121 = vector.extract_strided_slice %117 {offsets = [0, 192], sizes = [2, 64], strides = [1, 1]} : vector<2x256xf32> to vector<2x64xf32>
    %122 = arith.mulf %119, %101 : vector<2x64xf32>
    %123 = arith.mulf %118, %120 : vector<2x64xf32>
    %124 = arith.addf %122, %123 : vector<2x64xf32>
    %125 = math.tanh %124 : vector<2x64xf32>
    %126 = arith.mulf %121, %125 : vector<2x64xf32>
    %127 = vector.extract_strided_slice %7 {offsets = [0, 3, 0], sizes = [2, 1, 256], strides = [1, 1, 1]} : vector<2x8x256xf32> to vector<2x1x256xf32>
    %128 = vector.shape_cast %127 : vector<2x1x256xf32> to vector<2x256xf32>
    %129 = vector.extract_strided_slice %7 {offsets = [0, 4, 0], sizes = [2, 1, 256], strides = [1, 1, 1]} : vector<2x8x256xf32> to vector<2x1x256xf32>
    %130 = vector.shape_cast %129 : vector<2x1x256xf32> to vector<2x256xf32>
    %131 = arith.select %31, %128, %130 : vector<2x256xi1>, vector<2x256xf32>
    %cst_21 = arith.constant dense<0.000000e+00> : vector<2x256xf32>
    %132 = tpu.matmul %126, %32, %cst_21 {dimension_numbers = #tpu.dot_dimension_numbers<[1], [0], [0], [1], [0, 0, 1, 1], [], []>} : vector<2x64xf32>, vector<64x256xf32>, vector<2x256xf32> -> vector<2x256xf32>
    %133 = arith.addf %131, %132 : vector<2x256xf32>
    %134 = math.tanh %133 : vector<2x256xf32>
    %135 = arith.negf %133 : vector<2x256xf32>
    %136 = math.exp %135 : vector<2x256xf32>
    %cst_22 = arith.constant 1.000000e+00 : f32
    %137 = vector.broadcast %cst_22 : f32 to vector<2x256xf32>
    %138 = arith.addf %137, %136 : vector<2x256xf32>
    %139 = arith.divf %137, %138 : vector<2x256xf32>
    %140 = arith.select %13, %134, %139 : vector<2x256xi1>, vector<2x256xf32>
    %141 = vector.extract_strided_slice %140 {offsets = [0, 0], sizes = [2, 64], strides = [1, 1]} : vector<2x256xf32> to vector<2x64xf32>
    %142 = vector.extract_strided_slice %140 {offsets = [0, 64], sizes = [2, 64], strides = [1, 1]} : vector<2x256xf32> to vector<2x64xf32>
    %143 = vector.extract_strided_slice %140 {offsets = [0, 128], sizes = [2, 64], strides = [1, 1]} : vector<2x256xf32> to vector<2x64xf32>
    %144 = vector.extract_strided_slice %140 {offsets = [0, 192], sizes = [2, 64], strides = [1, 1]} : vector<2x256xf32> to vector<2x64xf32>
    %145 = arith.mulf %142, %124 : vector<2x64xf32>
    %146 = arith.mulf %141, %143 : vector<2x64xf32>
    %147 = arith.addf %145, %146 : vector<2x64xf32>
    %148 = math.tanh %147 : vector<2x64xf32>
    %149 = arith.mulf %144, %148 : vector<2x64xf32>
    %150 = vector.extract_strided_slice %7 {offsets = [0, 2, 0], sizes = [2, 1, 256], strides = [1, 1, 1]} : vector<2x8x256xf32> to vector<2x1x256xf32>
    %151 = vector.shape_cast %150 : vector<2x1x256xf32> to vector<2x256xf32>
    %152 = vector.extract_strided_slice %7 {offsets = [0, 5, 0], sizes = [2, 1, 256], strides = [1, 1, 1]} : vector<2x8x256xf32> to vector<2x1x256xf32>
    %153 = vector.shape_cast %152 : vector<2x1x256xf32> to vector<2x256xf32>
    %154 = arith.select %31, %151, %153 : vector<2x256xi1>, vector<2x256xf32>
    %cst_23 = arith.constant dense<0.000000e+00> : vector<2x256xf32>
    %155 = tpu.matmul %149, %32, %cst_23 {dimension_numbers = #tpu.dot_dimension_numbers<[1], [0], [0], [1], [0, 0, 1, 1], [], []>} : vector<2x64xf32>, vector<64x256xf32>, vector<2x256xf32> -> vector<2x256xf32>
    %156 = arith.addf %154, %155 : vector<2x256xf32>
    %157 = math.tanh %156 : vector<2x256xf32>
    %158 = arith.negf %156 : vector<2x256xf32>
    %159 = math.exp %158 : vector<2x256xf32>
    %cst_24 = arith.constant 1.000000e+00 : f32
    %160 = vector.broadcast %cst_24 : f32 to vector<2x256xf32>
    %161 = arith.addf %160, %159 : vector<2x256xf32>
    %162 = arith.divf %160, %161 : vector<2x256xf32>
    %163 = arith.select %13, %157, %162 : vector<2x256xi1>, vector<2x256xf32>
    %164 = vector.extract_strided_slice %163 {offsets = [0, 0], sizes = [2, 64], strides = [1, 1]} : vector<2x256xf32> to vector<2x64xf32>
    %165 = vector.extract_strided_slice %163 {offsets = [0, 64], sizes = [2, 64], strides = [1, 1]} : vector<2x256xf32> to vector<2x64xf32>
    %166 = vector.extract_strided_slice %163 {offsets = [0, 128], sizes = [2, 64], strides = [1, 1]} : vector<2x256xf32> to vector<2x64xf32>
    %167 = vector.extract_strided_slice %163 {offsets = [0, 192], sizes = [2, 64], strides = [1, 1]} : vector<2x256xf32> to vector<2x64xf32>
    %168 = arith.mulf %165, %147 : vector<2x64xf32>
    %169 = arith.mulf %164, %166 : vector<2x64xf32>
    %170 = arith.addf %168, %169 : vector<2x64xf32>
    %171 = math.tanh %170 : vector<2x64xf32>
    %172 = arith.mulf %167, %171 : vector<2x64xf32>
    %173 = vector.extract_strided_slice %7 {offsets = [0, 1, 0], sizes = [2, 1, 256], strides = [1, 1, 1]} : vector<2x8x256xf32> to vector<2x1x256xf32>
    %174 = vector.shape_cast %173 : vector<2x1x256xf32> to vector<2x256xf32>
    %175 = vector.extract_strided_slice %7 {offsets = [0, 6, 0], sizes = [2, 1, 256], strides = [1, 1, 1]} : vector<2x8x256xf32> to vector<2x1x256xf32>
    %176 = vector.shape_cast %175 : vector<2x1x256xf32> to vector<2x256xf32>
    %177 = arith.select %31, %174, %176 : vector<2x256xi1>, vector<2x256xf32>
    %cst_25 = arith.constant dense<0.000000e+00> : vector<2x256xf32>
    %178 = tpu.matmul %172, %32, %cst_25 {dimension_numbers = #tpu.dot_dimension_numbers<[1], [0], [0], [1], [0, 0, 1, 1], [], []>} : vector<2x64xf32>, vector<64x256xf32>, vector<2x256xf32> -> vector<2x256xf32>
    %179 = arith.addf %177, %178 : vector<2x256xf32>
    %180 = math.tanh %179 : vector<2x256xf32>
    %181 = arith.negf %179 : vector<2x256xf32>
    %182 = math.exp %181 : vector<2x256xf32>
    %cst_26 = arith.constant 1.000000e+00 : f32
    %183 = vector.broadcast %cst_26 : f32 to vector<2x256xf32>
    %184 = arith.addf %183, %182 : vector<2x256xf32>
    %185 = arith.divf %183, %184 : vector<2x256xf32>
    %186 = arith.select %13, %180, %185 : vector<2x256xi1>, vector<2x256xf32>
    %187 = vector.extract_strided_slice %186 {offsets = [0, 0], sizes = [2, 64], strides = [1, 1]} : vector<2x256xf32> to vector<2x64xf32>
    %188 = vector.extract_strided_slice %186 {offsets = [0, 64], sizes = [2, 64], strides = [1, 1]} : vector<2x256xf32> to vector<2x64xf32>
    %189 = vector.extract_strided_slice %186 {offsets = [0, 128], sizes = [2, 64], strides = [1, 1]} : vector<2x256xf32> to vector<2x64xf32>
    %190 = vector.extract_strided_slice %186 {offsets = [0, 192], sizes = [2, 64], strides = [1, 1]} : vector<2x256xf32> to vector<2x64xf32>
    %191 = arith.mulf %188, %170 : vector<2x64xf32>
    %192 = arith.mulf %187, %189 : vector<2x64xf32>
    %193 = arith.addf %191, %192 : vector<2x64xf32>
    %194 = math.tanh %193 : vector<2x64xf32>
    %195 = arith.mulf %190, %194 : vector<2x64xf32>
    %196 = vector.extract_strided_slice %7 {offsets = [0, 0, 0], sizes = [2, 1, 256], strides = [1, 1, 1]} : vector<2x8x256xf32> to vector<2x1x256xf32>
    %197 = vector.shape_cast %196 : vector<2x1x256xf32> to vector<2x256xf32>
    %198 = vector.extract_strided_slice %7 {offsets = [0, 7, 0], sizes = [2, 1, 256], strides = [1, 1, 1]} : vector<2x8x256xf32> to vector<2x1x256xf32>
    %199 = vector.shape_cast %198 : vector<2x1x256xf32> to vector<2x256xf32>
    %200 = arith.select %31, %197, %199 : vector<2x256xi1>, vector<2x256xf32>
    %cst_27 = arith.constant dense<0.000000e+00> : vector<2x256xf32>
    %201 = tpu.matmul %195, %32, %cst_27 {dimension_numbers = #tpu.dot_dimension_numbers<[1], [0], [0], [1], [0, 0, 1, 1], [], []>} : vector<2x64xf32>, vector<64x256xf32>, vector<2x256xf32> -> vector<2x256xf32>
    %202 = arith.addf %200, %201 : vector<2x256xf32>
    %203 = math.tanh %202 : vector<2x256xf32>
    %204 = arith.negf %202 : vector<2x256xf32>
    %205 = math.exp %204 : vector<2x256xf32>
    %cst_28 = arith.constant 1.000000e+00 : f32
    %206 = vector.broadcast %cst_28 : f32 to vector<2x256xf32>
    %207 = arith.addf %206, %205 : vector<2x256xf32>
    %208 = arith.divf %206, %207 : vector<2x256xf32>
    %209 = arith.select %13, %203, %208 : vector<2x256xi1>, vector<2x256xf32>
    %210 = vector.extract_strided_slice %209 {offsets = [0, 0], sizes = [2, 64], strides = [1, 1]} : vector<2x256xf32> to vector<2x64xf32>
    %211 = vector.extract_strided_slice %209 {offsets = [0, 64], sizes = [2, 64], strides = [1, 1]} : vector<2x256xf32> to vector<2x64xf32>
    %212 = vector.extract_strided_slice %209 {offsets = [0, 128], sizes = [2, 64], strides = [1, 1]} : vector<2x256xf32> to vector<2x64xf32>
    %213 = vector.extract_strided_slice %209 {offsets = [0, 192], sizes = [2, 64], strides = [1, 1]} : vector<2x256xf32> to vector<2x64xf32>
    %214 = arith.mulf %211, %193 : vector<2x64xf32>
    %215 = arith.mulf %210, %212 : vector<2x64xf32>
    %216 = arith.addf %214, %215 : vector<2x64xf32>
    %217 = math.tanh %216 : vector<2x64xf32>
    %218 = arith.mulf %213, %217 : vector<2x64xf32>
    %219 = vector.shape_cast %57 : vector<2x64xf32> to vector<2x1x64xf32>
    %220 = vector.shape_cast %80 : vector<2x64xf32> to vector<2x1x64xf32>
    %221 = vector.shape_cast %103 : vector<2x64xf32> to vector<2x1x64xf32>
    %222 = vector.shape_cast %126 : vector<2x64xf32> to vector<2x1x64xf32>
    %223 = vector.shape_cast %149 : vector<2x64xf32> to vector<2x1x64xf32>
    %224 = vector.shape_cast %172 : vector<2x64xf32> to vector<2x1x64xf32>
    %225 = vector.shape_cast %195 : vector<2x64xf32> to vector<2x1x64xf32>
    %226 = vector.shape_cast %218 : vector<2x64xf32> to vector<2x1x64xf32>
    %227 = tpu.concatenate %219, %220, %221, %222, %223, %224, %225, %226 in 1 : vector<2x1x64xf32>, vector<2x1x64xf32>, vector<2x1x64xf32>, vector<2x1x64xf32>, vector<2x1x64xf32>, vector<2x1x64xf32>, vector<2x1x64xf32>, vector<2x1x64xf32> -> vector<2x8x64xf32>
    %228 = vector.shape_cast %218 : vector<2x64xf32> to vector<2x1x64xf32>
    %229 = vector.shape_cast %195 : vector<2x64xf32> to vector<2x1x64xf32>
    %230 = vector.shape_cast %172 : vector<2x64xf32> to vector<2x1x64xf32>
    %231 = vector.shape_cast %149 : vector<2x64xf32> to vector<2x1x64xf32>
    %232 = vector.shape_cast %126 : vector<2x64xf32> to vector<2x1x64xf32>
    %233 = vector.shape_cast %103 : vector<2x64xf32> to vector<2x1x64xf32>
    %234 = vector.shape_cast %80 : vector<2x64xf32> to vector<2x1x64xf32>
    %235 = vector.shape_cast %57 : vector<2x64xf32> to vector<2x1x64xf32>
    %236 = tpu.concatenate %228, %229, %230, %231, %232, %233, %234, %235 in 1 : vector<2x1x64xf32>, vector<2x1x64xf32>, vector<2x1x64xf32>, vector<2x1x64xf32>, vector<2x1x64xf32>, vector<2x1x64xf32>, vector<2x1x64xf32>, vector<2x1x64xf32> -> vector<2x8x64xf32>
    %237 = tpu.iota {dimensions = array<i32: 2>} : vector<2x8x64xi32>
    %c32_i32_29 = arith.constant 32 : i32
    %238 = vector.broadcast %c32_i32_29 : i32 to vector<2x8x64xi32>
    %239 = arith.cmpi slt, %237, %238 : vector<2x8x64xi32>
    %240 = arith.select %239, %227, %236 : vector<2x8x64xi1>, vector<2x8x64xf32>
    %c0_30 = arith.constant 0 : index
    %c0_31 = arith.constant 0 : index
    %c0_32 = arith.constant 0 : index
    %241 = vector.load %arg4[%c0_30, %c0_31, %c0_32] : memref<2x8x64xf32, #tpu.memory_space<vmem>>, vector<2x8x64xf32>
    tpu.vector_store %arg4[%c0_30, %c0_31, %c0_32], %240 {strides = array<i32>} : memref<2x8x64xf32, #tpu.memory_space<vmem>>, vector<2x8x64xf32>,
    return
  }
}

module attributes {stable_mosaic.version = 11 : i64} {
  func.func @attn_fc_kernel(%arg0: memref<2x8x64xf32, #tpu.memory_space<vmem>>, %arg1: memref<64x16xf32, #tpu.memory_space<vmem>>, %arg2: memref<16x4xf32, #tpu.memory_space<vmem>>, %arg3: memref<4x64x8xf32, #tpu.memory_space<vmem>>, %arg4: memref<1x8xf32, #tpu.memory_space<vmem>>, %arg5: memref<2x8xf32, #tpu.memory_space<vmem>>, %arg6: memref<2x8x4xf32, #tpu.memory_space<vmem>>) attributes {dimension_semantics = [], scalar_prefetch = 0 : i64, scratch_operands = 0 : i64, tpu.core_type = #tpu.core_type<tc>} {
    %c0 = arith.constant 0 : index
    %c0_0 = arith.constant 0 : index
    %c0_1 = arith.constant 0 : index
    %0 = vector.load %arg0[%c0, %c0_0, %c0_1] : memref<2x8x64xf32, #tpu.memory_space<vmem>>, vector<2x8x64xf32>
    %1 = vector.shape_cast %0 : vector<2x8x64xf32> to vector<16x64xf32>
    %c0_2 = arith.constant 0 : index
    %c0_3 = arith.constant 0 : index
    %2 = vector.load %arg1[%c0_2, %c0_3] : memref<64x16xf32, #tpu.memory_space<vmem>>, vector<64x16xf32>
    %cst = arith.constant dense<0.000000e+00> : vector<16x16xf32>
    %3 = tpu.matmul %1, %2, %cst {dimension_numbers = #tpu.dot_dimension_numbers<[1], [0], [0], [1], [0, 0, 1, 1], [], []>} : vector<16x64xf32>, vector<64x16xf32>, vector<16x16xf32> -> vector<16x16xf32>
    %4 = math.tanh %3 : vector<16x16xf32>
    %c0_4 = arith.constant 0 : index
    %c0_5 = arith.constant 0 : index
    %5 = vector.load %arg2[%c0_4, %c0_5] : memref<16x4xf32, #tpu.memory_space<vmem>>, vector<16x4xf32>
    %cst_6 = arith.constant dense<0.000000e+00> : vector<16x4xf32>
    %6 = tpu.matmul %4, %5, %cst_6 {dimension_numbers = #tpu.dot_dimension_numbers<[1], [0], [0], [1], [0, 0, 1, 1], [], []>} : vector<16x16xf32>, vector<16x4xf32>, vector<16x4xf32> -> vector<16x4xf32>
    %7 = vector.shape_cast %6 : vector<16x4xf32> to vector<2x8x4xf32>
    %cst_7 = arith.constant dense<0xFF800000> : vector<2x4xf32>
    %8 = vector.multi_reduction <maximumf>, %7, %cst_7 [1] : vector<2x8x4xf32> to vector<2x4xf32>
    %9 = vector.shape_cast %8 : vector<2x4xf32> to vector<2x1x4xf32>
    %10 = vector.broadcast %9 : vector<2x1x4xf32> to vector<2x8x4xf32>
    %11 = arith.subf %7, %10 : vector<2x8x4xf32>
    %12 = math.exp %11 : vector<2x8x4xf32>
    %cst_8 = arith.constant dense<0.000000e+00> : vector<2x4xf32>
    %13 = vector.multi_reduction <add>, %12, %cst_8 [1] : vector<2x8x4xf32> to vector<2x4xf32>
    %14 = vector.shape_cast %13 : vector<2x4xf32> to vector<2x1x4xf32>
    %15 = tpu.reciprocal %14 {approx = true} : vector<2x1x4xf32> -> vector<2x1x4xf32>
    %16 = vector.broadcast %15 : vector<2x1x4xf32> to vector<2x8x4xf32>
    %17 = arith.mulf %12, %16 : vector<2x8x4xf32>
    %c0_9 = arith.constant 0 : index
    %c0_10 = arith.constant 0 : index
    %c0_11 = arith.constant 0 : index
    %18 = vector.load %arg6[%c0_9, %c0_10, %c0_11] : memref<2x8x4xf32, #tpu.memory_space<vmem>>, vector<2x8x4xf32>
    tpu.vector_store %arg6[%c0_9, %c0_10, %c0_11], %17 {strides = array<i32>} : memref<2x8x4xf32, #tpu.memory_space<vmem>>, vector<2x8x4xf32>,
    %c0_12 = arith.constant 0 : index
    %c0_13 = arith.constant 0 : index
    %19 = vector.load %arg4[%c0_12, %c0_13] : memref<1x8xf32, #tpu.memory_space<vmem>>, vector<1x8xf32>
    %20 = vector.extract_strided_slice %17 {offsets = [0, 0, 0], sizes = [2, 8, 1], strides = [1, 1, 1]} : vector<2x8x4xf32> to vector<2x8x1xf32>
    %21 = vector.broadcast %20 : vector<2x8x1xf32> to vector<2x8x64xf32>
    %22 = arith.mulf %21, %0 : vector<2x8x64xf32>
    %cst_14 = arith.constant dense<0.000000e+00> : vector<2x64xf32>
    %23 = vector.multi_reduction <add>, %22, %cst_14 [1] : vector<2x8x64xf32> to vector<2x64xf32>
    %c0_15 = arith.constant 0 : index
    %c0_16 = arith.constant 0 : index
    %c0_17 = arith.constant 0 : index
    %24 = vector.load %arg3[%c0_15, %c0_16, %c0_17] : memref<4x64x8xf32, #tpu.memory_space<vmem>>, vector<1x64x8xf32>
    %25 = vector.shape_cast %24 : vector<1x64x8xf32> to vector<64x8xf32>
    %cst_18 = arith.constant dense<0.000000e+00> : vector<2x8xf32>
    %26 = tpu.matmul %23, %25, %cst_18 {dimension_numbers = #tpu.dot_dimension_numbers<[1], [0], [0], [1], [0, 0, 1, 1], [], []>} : vector<2x64xf32>, vector<64x8xf32>, vector<2x8xf32> -> vector<2x8xf32>
    %27 = vector.broadcast %19 : vector<1x8xf32> to vector<2x8xf32>
    %28 = arith.addf %27, %26 : vector<2x8xf32>
    %29 = vector.extract_strided_slice %17 {offsets = [0, 0, 1], sizes = [2, 8, 1], strides = [1, 1, 1]} : vector<2x8x4xf32> to vector<2x8x1xf32>
    %30 = vector.broadcast %29 : vector<2x8x1xf32> to vector<2x8x64xf32>
    %31 = arith.mulf %30, %0 : vector<2x8x64xf32>
    %cst_19 = arith.constant dense<0.000000e+00> : vector<2x64xf32>
    %32 = vector.multi_reduction <add>, %31, %cst_19 [1] : vector<2x8x64xf32> to vector<2x64xf32>
    %c1 = arith.constant 1 : index
    %c0_20 = arith.constant 0 : index
    %c0_21 = arith.constant 0 : index
    %33 = vector.load %arg3[%c1, %c0_20, %c0_21] : memref<4x64x8xf32, #tpu.memory_space<vmem>>, vector<1x64x8xf32>
    %34 = vector.shape_cast %33 : vector<1x64x8xf32> to vector<64x8xf32>
    %cst_22 = arith.constant dense<0.000000e+00> : vector<2x8xf32>
    %35 = tpu.matmul %32, %34, %cst_22 {dimension_numbers = #tpu.dot_dimension_numbers<[1], [0], [0], [1], [0, 0, 1, 1], [], []>} : vector<2x64xf32>, vector<64x8xf32>, vector<2x8xf32> -> vector<2x8xf32>
    %36 = arith.addf %28, %35 : vector<2x8xf32>
    %37 = vector.extract_strided_slice %17 {offsets = [0, 0, 2], sizes = [2, 8, 1], strides = [1, 1, 1]} : vector<2x8x4xf32> to vector<2x8x1xf32>
    %38 = vector.broadcast %37 : vector<2x8x1xf32> to vector<2x8x64xf32>
    %39 = arith.mulf %38, %0 : vector<2x8x64xf32>
    %cst_23 = arith.constant dense<0.000000e+00> : vector<2x64xf32>
    %40 = vector.multi_reduction <add>, %39, %cst_23 [1] : vector<2x8x64xf32> to vector<2x64xf32>
    %c2 = arith.constant 2 : index
    %c0_24 = arith.constant 0 : index
    %c0_25 = arith.constant 0 : index
    %41 = vector.load %arg3[%c2, %c0_24, %c0_25] : memref<4x64x8xf32, #tpu.memory_space<vmem>>, vector<1x64x8xf32>
    %42 = vector.shape_cast %41 : vector<1x64x8xf32> to vector<64x8xf32>
    %cst_26 = arith.constant dense<0.000000e+00> : vector<2x8xf32>
    %43 = tpu.matmul %40, %42, %cst_26 {dimension_numbers = #tpu.dot_dimension_numbers<[1], [0], [0], [1], [0, 0, 1, 1], [], []>} : vector<2x64xf32>, vector<64x8xf32>, vector<2x8xf32> -> vector<2x8xf32>
    %44 = arith.addf %36, %43 : vector<2x8xf32>
    %45 = vector.extract_strided_slice %17 {offsets = [0, 0, 3], sizes = [2, 8, 1], strides = [1, 1, 1]} : vector<2x8x4xf32> to vector<2x8x1xf32>
    %46 = vector.broadcast %45 : vector<2x8x1xf32> to vector<2x8x64xf32>
    %47 = arith.mulf %46, %0 : vector<2x8x64xf32>
    %cst_27 = arith.constant dense<0.000000e+00> : vector<2x64xf32>
    %48 = vector.multi_reduction <add>, %47, %cst_27 [1] : vector<2x8x64xf32> to vector<2x64xf32>
    %c3 = arith.constant 3 : index
    %c0_28 = arith.constant 0 : index
    %c0_29 = arith.constant 0 : index
    %49 = vector.load %arg3[%c3, %c0_28, %c0_29] : memref<4x64x8xf32, #tpu.memory_space<vmem>>, vector<1x64x8xf32>
    %50 = vector.shape_cast %49 : vector<1x64x8xf32> to vector<64x8xf32>
    %cst_30 = arith.constant dense<0.000000e+00> : vector<2x8xf32>
    %51 = tpu.matmul %48, %50, %cst_30 {dimension_numbers = #tpu.dot_dimension_numbers<[1], [0], [0], [1], [0, 0, 1, 1], [], []>} : vector<2x64xf32>, vector<64x8xf32>, vector<2x8xf32> -> vector<2x8xf32>
    %52 = arith.addf %44, %51 : vector<2x8xf32>
    %c0_31 = arith.constant 0 : index
    %c0_32 = arith.constant 0 : index
    %53 = vector.load %arg5[%c0_31, %c0_32] : memref<2x8xf32, #tpu.memory_space<vmem>>, vector<2x8xf32>
    tpu.vector_store %arg5[%c0_31, %c0_32], %52 {strides = array<i32>} : memref<2x8xf32, #tpu.memory_space<vmem>>, vector<2x8xf32>,
    return
  }
}

</mosaic_0001>

<llo_original>
// kernel: self_attn_series_lstm_forward.3
$region0: #{self_attn_series_lstm_forward.3}
  #allocation0 [shape = 'u32[]', space=smem, size = 0x4, offset = 0x4, fixed_abs, tag = 'smem constant byte address 0x4 - core index']
  #allocation1 [shape = 'u32[144,128]{1,0:T(1,128)}', space=vmem, size = 0x12000, scoped, tag = 'internal scratch']
  %s0 = inlined_call_operand.vmem [shape: f32[2,8,64], index: 0, kind: input, shape index: {}]
  %s1 = inlined_call_operand.vmem [shape: f32[64,16], index: 1, kind: input, shape index: {}]
  %s2 = inlined_call_operand.vmem [shape: f32[16,4], index: 2, kind: input, shape index: {}]
  %s3 = inlined_call_operand.vmem [shape: f32[4,64,8], index: 3, kind: input, shape index: {}]
  %s4 = inlined_call_operand.vmem [shape: f32[1,8], index: 4, kind: input, shape index: {}]
  %s5 = inlined_call_operand.hbm [shape: f32[2,8], index: 5, kind: output, shape index: {0}]
  %s6 = inlined_call_operand.vmem [shape: f32[2,8,4], index: 6, kind: output, shape index: {1}]
  %7 = xla_tuple %s5, %s6
  %s8 = sld [smem:[#allocation0]]
  $region38: #{self_attn_series_lstm_forward.3} parent=0
    _
  %s10 = ssub.s32 1, %s8
  %s11 = scalar_select 0, %s10, %s8
  $region1: #{self_attn_series_lstm_forward.3} parent=0
    #allocation2 [shape = 'u8[1024]{0}', space=vmem, size = 0x400, scoped, tag = 'output window, operand 0, single buffered']
    #allocation3 [shape = 's32[1]{0}', space=sflag, size = 0x4, scoped, tag = 'scoped memory for self_attn_series_lstm_forward.3']
    %12 = vsyncpa [#allocation3], 0
    // Predicated region
    $region2: #{self_attn_series_lstm_forward.3} parent=1 // pred_check
      _
    $region3: #{self_attn_series_lstm_forward.3} parent=1 // pred_check_branch
      %14 = sbr.rel (0) target = $region5
    $region4: #{self_attn_series_lstm_forward.3} parent=1 // pred_region
      _
    $region5: #{self_attn_series_lstm_forward.3} parent=1 // pred_fallthru
      _
    // Predicated region
    $region6: #{self_attn_series_lstm_forward.3} parent=1 // pred_check
      _
    $region7: #{self_attn_series_lstm_forward.3} parent=1 // pred_check_branch
      %16 = sbr.rel (0) target = $region9
    $region8: #{self_attn_series_lstm_forward.3} parent=1 // pred_region
      _
    $region9: #{self_attn_series_lstm_forward.3} parent=1 // pred_fallthru
      _
    // Predicated region
    $region10: #{self_attn_series_lstm_forward.3} parent=1 // pred_check
      _
    $region11: #{self_attn_series_lstm_forward.3} parent=1 // pred_check_branch
      %18 = sbr.rel (0) target = $region13
    $region12: #{self_attn_series_lstm_forward.3} parent=1 // pred_region
      _
    $region13: #{self_attn_series_lstm_forward.3} parent=1 // pred_fallthru
      _
    // Predicated region
    $region14: #{self_attn_series_lstm_forward.3} parent=1 // pred_check
      _
    $region15: #{self_attn_series_lstm_forward.3} parent=1 // pred_check_branch
      %20 = sbr.rel (0) target = $region17
    $region16: #{self_attn_series_lstm_forward.3} parent=1 // pred_region
      _
    $region17: #{self_attn_series_lstm_forward.3} parent=1 // pred_fallthru
      _
    // Predicated region
    $region18: #{self_attn_series_lstm_forward.3} parent=1 // pred_check
      _
    $region19: #{self_attn_series_lstm_forward.3} parent=1 // pred_check_branch
      %22 = sbr.rel (0) target = $region21
    $region20: #{self_attn_series_lstm_forward.3} parent=1 // pred_region
      _
    $region21: #{self_attn_series_lstm_forward.3} parent=1 // pred_fallthru
      _
    %v23 = vld [vmem:[%s0] sm:$0xff]
    %v24 = vld [vmem:[%s0 + $0x8] sm:$0xff]
    %v25 = vld [vmem:[%s1] sm:$0xff]
    %v26 = vld [vmem:[%s1 + $0x8] sm:$0xff]
    %v27 = vld [vmem:[%s1 + $0x10] sm:$0xff]
    %v28 = vld [vmem:[%s1 + $0x18] sm:$0xff]
    %v29 = vld [vmem:[%s1 + $0x20] sm:$0xff]
    %v30 = vld [vmem:[%s1 + $0x28] sm:$0xff]
    %v31 = vld [vmem:[%s1 + $0x30] sm:$0xff]
    %v32 = vld [vmem:[%s1 + $0x38] sm:$0xff]
    %vm33 = vcmask 523264
    %v35 = vsel %vm33, %v23, 0
    %v38 = vsel %vm33, %v24, 0
    %40 = vmatprep.subr.mxu0 0.0
    %41 = vmatpush1.msra.mxu0 %v25
    %42 = vmatprep.subr.mxu0 0.0
    %43 = vmatpush1.msra.mxu0 %v26
    %44 = vmatprep.subr.mxu0 0.0
    %45 = vmatpush1.msra.mxu0 %v27
    %46 = vmatprep.subr.mxu0 0.0
    %47 = vmatpush1.msra.mxu0 %v28
    %48 = vmatprep.subr.mxu0 0.0
    %49 = vmatpush1.msra.mxu0 %v29
    %50 = vmatprep.subr.mxu0 0.0
    %51 = vmatpush1.msra.mxu0 %v30
    %52 = vmatprep.subr.mxu0 0.0
    %53 = vmatpush1.msra.mxu0 %v31
    %54 = vmatprep.subr.mxu0 0.0
    %55 = vmatpush1.msra.mxu0 %v32
    %56 = vmatprep.subr.mxu0 0.0
    %57 = vmatpush1.msra.mxu0 0.0
    %58 = vmatprep.subr.mxu0 0.0
    %59 = vmatpush1.msra.mxu0 0.0
    %60 = vmatprep.subr.mxu0 0.0
    %61 = vmatpush1.msra.mxu0 0.0
    %62 = vmatprep.subr.mxu0 0.0
    %63 = vmatpush1.msra.mxu0 0.0
    %64 = vmatprep.subr.mxu0 0.0
    %65 = vmatpush1.msra.mxu0 0.0
    %66 = vmatprep.subr.mxu0 0.0
    %67 = vmatpush1.msra.mxu0 0.0
    %68 = vmatprep.subr.mxu0 0.0
    %69 = vmatpush1.msra.mxu0 0.0
    %70 = vmatprep.subr.mxu0 0.0
    %71 = vmatpush1.msra.mxu0 0.0
    %72 = vmatprep.subr.mxu0 0.0
    %73 = vmatpush1.msra.mxu0 0.0
    %74 = vmatprep.subr.mxu0 0.0
    %75 = vmatpush1.msra.mxu0 0.0
    %76 = vmatprep.subr.mxu0 0.0
    %77 = vmatpush1.msra.mxu0 0.0
    %78 = vmatprep.subr.mxu0 0.0
    %79 = vmatpush1.msra.mxu0 0.0
    %80 = vmatprep.subr.mxu0 0.0
    %81 = vmatpush1.msra.mxu0 0.0
    %82 = vmatprep.subr.mxu0 0.0
    %83 = vmatpush1.msra.mxu0 0.0
    %84 = vmatprep.subr.mxu0 0.0
    %85 = vmatpush1.msra.mxu0 0.0
    %86 = vmatprep.subr.mxu0 0.0
    %87 = vmatpush1.msra.mxu0 0.0
    %88 = vmatprep.subr.mxu0 0.0
    %89 = vmatpush1.msra.mxu0 0.0
    %90 = vmatprep.subr.mxu0 0.0
    %91 = vmatpush1.msra.mxu0 0.0
    %92 = vmatprep.subr.mxu0 0.0
    %93 = vmatpush1.msra.mxu0 0.0
    %94 = vmatprep.subr.mxu0 0.0
    %95 = vmatpush1.msra.mxu0 0.0
    %96 = vmatprep.subr.mxu0 0.0
    %97 = vmatpush1.msra.mxu0 0.0
    %98 = vmatprep.subr.mxu0 0.0
    %99 = vmatpush1.msra.mxu0 0.0
    %100 = vmatprep.subr.mxu0 0.0
    %101 = vmatpush1.msra.mxu0 0.0
    %102 = vmatprep.subr.mxu0 0.0
    %103 = vmatpush1.msra.mxu0 0.0
    %104 = vmatprep.mubr.f32.mxu0 0.0
    %105 = vmatmul.mubr.f32.gmra.mrb[0].mxu0 %v35
    %v106 = vpop.f32.mrb[0].mxu0
    %v107 = vadd.f32 0.0, %v106
    %v108 = vpop.f32.mrb[0].mxu0
    %109 = vmatprep.mubr.f32.mxu0 0.0
    %110 = vmatmul.mubr.f32.gmra.mrb[0].mxu0 %v38
    %v111 = vpop.f32.mrb[0].mxu0
    %v112 = vadd.f32 0.0, %v111
    %v113 = vpop.f32.mrb[0].mxu0
    %114 = vdwg.mxu0
    %v115 = vtanh.pop %v107
    %v116 = vtanh.pop %v112
    %v117 = vld [vmem:[%s2] sm:$0xff]
    %v118 = vld [vmem:[%s2 + $0x8] sm:$0xff]
    %vm119 = vcmask 130048
    %v121 = vsel %vm119, %v115, 0
    %v124 = vsel %vm119, %v116, 0
    %126 = vmatprep.subr.mxu0 0.0
    %127 = vmatpush1.msra.mxu0 %v117
    %128 = vmatprep.subr.mxu0 0.0
    %129 = vmatpush1.msra.mxu0 %v118
    %130 = vmatprep.subr.mxu0 0.0
    %131 = vmatpush1.msra.mxu0 0.0
    %132 = vmatprep.subr.mxu0 0.0
    %133 = vmatpush1.msra.mxu0 0.0
    %134 = vmatprep.subr.mxu0 0.0
    %135 = vmatpush1.msra.mxu0 0.0
    %136 = vmatprep.subr.mxu0 0.0
    %137 = vmatpush1.msra.mxu0 0.0
    %138 = vmatprep.subr.mxu0 0.0
    %139 = vmatpush1.msra.mxu0 0.0
    %140 = vmatprep.subr.mxu0 0.0
    %141 = vmatpush1.msra.mxu0 0.0
    %142 = vmatprep.subr.mxu0 0.0
    %143 = vmatpush1.msra.mxu0 0.0
    %144 = vmatprep.subr.mxu0 0.0
    %145 = vmatpush1.msra.mxu0 0.0
    %146 = vmatprep.subr.mxu0 0.0
    %147 = vmatpush1.msra.mxu0 0.0
    %148 = vmatprep.subr.mxu0 0.0
    %149 = vmatpush1.msra.mxu0 0.0
    %150 = vmatprep.subr.mxu0 0.0
    %151 = vmatpush1.msra.mxu0 0.0
    %152 = vmatprep.subr.mxu0 0.0
    %153 = vmatpush1.msra.mxu0 0.0
    %154 = vmatprep.subr.mxu0 0.0
    %155 = vmatpush1.msra.mxu0 0.0
    %156 = vmatprep.subr.mxu0 0.0
    %157 = vmatpush1.msra.mxu0 0.0
    %158 = vmatprep.subr.mxu0 0.0
    %159 = vmatpush1.msra.mxu0 0.0
    %160 = vmatprep.subr.mxu0 0.0
    %161 = vmatpush1.msra.mxu0 0.0
    %162 = vmatprep.subr.mxu0 0.0
    %163 = vmatpush1.msra.mxu0 0.0
    %164 = vmatprep.subr.mxu0 0.0
    %165 = vmatpush1.msra.mxu0 0.0
    %166 = vmatprep.subr.mxu0 0.0
    %167 = vmatpush1.msra.mxu0 0.0
    %168 = vmatprep.subr.mxu0 0.0
    %169 = vmatpush1.msra.mxu0 0.0
    %170 = vmatprep.subr.mxu0 0.0
    %171 = vmatpush1.msra.mxu0 0.0
    %172 = vmatprep.subr.mxu0 0.0
    %173 = vmatpush1.msra.mxu0 0.0
    %174 = vmatprep.subr.mxu0 0.0
    %175 = vmatpush1.msra.mxu0 0.0
    %176 = vmatprep.subr.mxu0 0.0
    %177 = vmatpush1.msra.mxu0 0.0
    %178 = vmatprep.subr.mxu0 0.0
    %179 = vmatpush1.msra.mxu0 0.0
    %180 = vmatprep.subr.mxu0 0.0
    %181 = vmatpush1.msra.mxu0 0.0
    %182 = vmatprep.subr.mxu0 0.0
    %183 = vmatpush1.msra.mxu0 0.0
    %184 = vmatprep.subr.mxu0 0.0
    %185 = vmatpush1.msra.mxu0 0.0
    %186 = vmatprep.subr.mxu0 0.0
    %187 = vmatpush1.msra.mxu0 0.0
    %188 = vmatprep.subr.mxu0 0.0
    %189 = vmatpush1.msra.mxu0 0.0
    %190 = vmatprep.mubr.f32.mxu0 0.0
    %191 = vmatmul.mubr.f32.gmra.mrb[0].mxu0 %v121
    %v192 = vpop.f32.mrb[0].mxu0
    %v193 = vadd.f32 0.0, %v192
    %v194 = vpop.f32.mrb[0].mxu0
    %195 = vmatprep.mubr.f32.mxu0 0.0
    %196 = vmatmul.mubr.f32.gmra.mrb[0].mxu0 %v124
    %v197 = vpop.f32.mrb[0].mxu0
    %v198 = vadd.f32 0.0, %v197
    %v199 = vpop.f32.mrb[0].mxu0
    %200 = vdwg.mxu0
    %vm201 = vcmask 31744
    %v202 = vsel %vm201, %v193, -inf
    %v203 = vrot.slane %v202, 4
    %v204 = vmax.f32 %v202, %v203
    %v205 = vrot.slane %v204, 2
    %v206 = vmax.f32 %v204, %v205
    %v207 = vrot.slane %v206, 1
    %v208 = vmax.f32 %v206, %v207
    %v209 = vsel %vm201, %v198, -inf
    %v210 = vrot.slane %v209, 4
    %v211 = vmax.f32 %v209, %v210
    %v212 = vrot.slane %v211, 2
    %v213 = vmax.f32 %v211, %v212
    %v214 = vrot.slane %v213, 1
    %v215 = vmax.f32 %v213, %v214
    %v216 = vsub.f32 %v193, %v208
    %v217 = vsub.f32 %v198, %v215
    %v218 = vmul.f32 %v216, 1.442695
    %v219 = vpow.pop %v218
    %v220 = vmul.f32 %v217, 1.442695
    %v221 = vpow.pop %v220
    %v222 = vsel %vm201, %v219, 0.0
    %v223 = vrot.slane %v222, 4
    %v224 = vadd.f32 %v222, %v223
    %v225 = vrot.slane %v224, 2
    %v226 = vadd.f32 %v224, %v225
    %v227 = vrot.slane %v226, 1
    %v228 = vadd.f32 %v226, %v227
    %v229 = vsel %vm201, %v221, 0.0
    %v230 = vrot.slane %v229, 4
    %v231 = vadd.f32 %v229, %v230
    %v232 = vrot.slane %v231, 2
    %v233 = vadd.f32 %v231, %v232
    %v234 = vrot.slane %v233, 1
    %v235 = vadd.f32 %v233, %v234
    %v236 = vrcp.pop %v228
    %v237 = vrcp.pop %v235
    %v238 = vmul.f32 %v219, %v236
    %v239 = vmul.f32 %v221, %v237
    %240 = vst.msk [vmem:[%s6] sm:$0xff] %vm201, %v238
    %241 = vst.msk [vmem:[%s6 + $0x8] sm:$0xff] %vm201, %v239
    %v242 = vld [vmem:[%s4] sm:$0x1]
    %244 = vset.pattern.permute.xlu0 0
    %245 = vperm.xlu0 %244, %v238
    %v246 = vpop.permute.xlu0 %245
    %249 = vset.pattern.permute.xlu0 0
    %250 = vperm.xlu0 %249, %v239
    %v251 = vpop.permute.xlu0 %250
    %v253 = vmul.f32 %v246, %v23
    %v254 = vmul.f32 %v251, %v24
    %v255 = vsel %vm33, %v253, 0.0
    %v256 = vrot.slane %v255, 4
    %v257 = vadd.f32 %v255, %v256
    %v258 = vrot.slane %v257, 2
    %v259 = vadd.f32 %v257, %v258
    %v260 = vrot.slane %v259, 1
    %v261 = vadd.f32 %v259, %v260
    %v262 = vsel %vm33, %v254, 0.0
    %v263 = vrot.slane %v262, 4
    %v264 = vadd.f32 %v262, %v263
    %v265 = vrot.slane %v264, 2
    %v266 = vadd.f32 %v264, %v265
    %v267 = vrot.slane %v266, 1
    %v268 = vadd.f32 %v266, %v267
    %v269 = vld [vmem:[%s3] sm:$0xff]
    %v270 = vld [vmem:[%s3 + $0x8] sm:$0xff]
    %v271 = vld [vmem:[%s3 + $0x10] sm:$0xff]
    %v272 = vld [vmem:[%s3 + $0x18] sm:$0xff]
    %v273 = vld [vmem:[%s3 + $0x20] sm:$0xff]
    %v274 = vld [vmem:[%s3 + $0x28] sm:$0xff]
    %v275 = vld [vmem:[%s3 + $0x30] sm:$0xff]
    %v276 = vld [vmem:[%s3 + $0x38] sm:$0xff]
    %vm279 = vcmask 1041409
    %v280 = vsel %vm279, %v268, %v261
    %v281 = vsel %vm33, %v280, 0
    %283 = vmatprep.subr.mxu0 0.0
    %284 = vmatpush1.msra.mxu0 %v269
    %285 = vmatprep.subr.mxu0 0.0
    %286 = vmatpush1.msra.mxu0 %v270
    %287 = vmatprep.subr.mxu0 0.0
    %288 = vmatpush1.msra.mxu0 %v271
    %289 = vmatprep.subr.mxu0 0.0
    %290 = vmatpush1.msra.mxu0 %v272
    %291 = vmatprep.subr.mxu0 0.0
    %292 = vmatpush1.msra.mxu0 %v273
    %293 = vmatprep.subr.mxu0 0.0
    %294 = vmatpush1.msra.mxu0 %v274
    %295 = vmatprep.subr.mxu0 0.0
    %296 = vmatpush1.msra.mxu0 %v275
    %297 = vmatprep.subr.mxu0 0.0
    %298 = vmatpush1.msra.mxu0 %v276
    %299 = vmatprep.subr.mxu0 0.0
    %300 = vmatpush1.msra.mxu0 0.0
    %301 = vmatprep.subr.mxu0 0.0
    %302 = vmatpush1.msra.mxu0 0.0
    %303 = vmatprep.subr.mxu0 0.0
    %304 = vmatpush1.msra.mxu0 0.0
    %305 = vmatprep.subr.mxu0 0.0
    %306 = vmatpush1.msra.mxu0 0.0
    %307 = vmatprep.subr.mxu0 0.0
    %308 = vmatpush1.msra.mxu0 0.0
    %309 = vmatprep.subr.mxu0 0.0
    %310 = vmatpush1.msra.mxu0 0.0
    %311 = vmatprep.subr.mxu0 0.0
    %312 = vmatpush1.msra.mxu0 0.0
    %313 = vmatprep.subr.mxu0 0.0
    %314 = vmatpush1.msra.mxu0 0.0
    %315 = vmatprep.subr.mxu0 0.0
    %316 = vmatpush1.msra.mxu0 0.0
    %317 = vmatprep.subr.mxu0 0.0
    %318 = vmatpush1.msra.mxu0 0.0
    %319 = vmatprep.subr.mxu0 0.0
    %320 = vmatpush1.msra.mxu0 0.0
    %321 = vmatprep.subr.mxu0 0.0
    %322 = vmatpush1.msra.mxu0 0.0
    %323 = vmatprep.subr.mxu0 0.0
    %324 = vmatpush1.msra.mxu0 0.0
    %325 = vmatprep.subr.mxu0 0.0
    %326 = vmatpush1.msra.mxu0 0.0
    %327 = vmatprep.subr.mxu0 0.0
    %328 = vmatpush1.msra.mxu0 0.0
    %329 = vmatprep.subr.mxu0 0.0
    %330 = vmatpush1.msra.mxu0 0.0
    %331 = vmatprep.subr.mxu0 0.0
    %332 = vmatpush1.msra.mxu0 0.0
    %333 = vmatprep.subr.mxu0 0.0
    %334 = vmatpush1.msra.mxu0 0.0
    %335 = vmatprep.subr.mxu0 0.0
    %336 = vmatpush1.msra.mxu0 0.0
    %337 = vmatprep.subr.mxu0 0.0
    %338 = vmatpush1.msra.mxu0 0.0
    %339 = vmatprep.subr.mxu0 0.0
    %340 = vmatpush1.msra.mxu0 0.0
    %341 = vmatprep.subr.mxu0 0.0
    %342 = vmatpush1.msra.mxu0 0.0
    %343 = vmatprep.subr.mxu0 0.0
    %344 = vmatpush1.msra.mxu0 0.0
    %345 = vmatprep.subr.mxu0 0.0
    %346 = vmatpush1.msra.mxu0 0.0
    %347 = vmatprep.mubr.f32.mxu0 0.0
    %348 = vmatmul.mubr.f32.gmra.mrb[0].mxu0 %v281
    %v349 = vpop.f32.mrb[0].mxu0
    %v350 = vadd.f32 0.0, %v349
    %v351 = vpop.f32.mrb[0].mxu0
    %352 = vdwg.mxu0
    %v354 = vlaneseq
    %v355 = vshrl.u32 %v354, 7
    %v356 = vsub.s32 0, %v355
    %v357 = vrot.slane %v242, %v356
    %v359 = vadd.f32 %v357, %v350
    %360 = vset.pattern.permute.xlu0 1
    %361 = vperm.xlu0 %360, %v238
    %v362 = vpop.permute.xlu0 %361
    %364 = vset.pattern.permute.xlu0 1
    %365 = vperm.xlu0 %364, %v239
    %v366 = vpop.permute.xlu0 %365
    %v368 = vmul.f32 %v362, %v23
    %v369 = vmul.f32 %v366, %v24
    %v370 = vsel %vm33, %v368, 0.0
    %v371 = vrot.slane %v370, 4
    %v372 = vadd.f32 %v370, %v371
    %v373 = vrot.slane %v372, 2
    %v374 = vadd.f32 %v372, %v373
    %v375 = vrot.slane %v374, 1
    %v376 = vadd.f32 %v374, %v375
    %v377 = vsel %vm33, %v369, 0.0
    %v378 = vrot.slane %v377, 4
    %v379 = vadd.f32 %v377, %v378
    %v380 = vrot.slane %v379, 2
    %v381 = vadd.f32 %v379, %v380
    %v382 = vrot.slane %v381, 1
    %v383 = vadd.f32 %v381, %v382
    %s384 = scalar_lea.vmem %s3, 64
    %v385 = vld [vmem:[%s384] sm:$0xff]
    %v386 = vld [vmem:[%s384 + $0x8] sm:$0xff]
    %v387 = vld [vmem:[%s384 + $0x10] sm:$0xff]
    %v388 = vld [vmem:[%s384 + $0x18] sm:$0xff]
    %v389 = vld [vmem:[%s384 + $0x20] sm:$0xff]
    %v390 = vld [vmem:[%s384 + $0x28] sm:$0xff]
    %v391 = vld [vmem:[%s384 + $0x30] sm:$0xff]
    %v392 = vld [vmem:[%s384 + $0x38] sm:$0xff]
    %v395 = vsel %vm279, %v383, %v376
    %v396 = vsel %vm33, %v395, 0
    %398 = vmatprep.subr.mxu0 0.0
    %399 = vmatpush1.msra.mxu0 %v385
    %400 = vmatprep.subr.mxu0 0.0
    %401 = vmatpush1.msra.mxu0 %v386
    %402 = vmatprep.subr.mxu0 0.0
    %403 = vmatpush1.msra.mxu0 %v387
    %404 = vmatprep.subr.mxu0 0.0
    %405 = vmatpush1.msra.mxu0 %v388
    %406 = vmatprep.subr.mxu0 0.0
    %407 = vmatpush1.msra.mxu0 %v389
    %408 = vmatprep.subr.mxu0 0.0
    %409 = vmatpush1.msra.mxu0 %v390
    %410 = vmatprep.subr.mxu0 0.0
    %411 = vmatpush1.msra.mxu0 %v391
    %412 = vmatprep.subr.mxu0 0.0
    %413 = vmatpush1.msra.mxu0 %v392
    %414 = vmatprep.subr.mxu0 0.0
    %415 = vmatpush1.msra.mxu0 0.0
    %416 = vmatprep.subr.mxu0 0.0
    %417 = vmatpush1.msra.mxu0 0.0
    %418 = vmatprep.subr.mxu0 0.0
    %419 = vmatpush1.msra.mxu0 0.0
    %420 = vmatprep.subr.mxu0 0.0
    %421 = vmatpush1.msra.mxu0 0.0
    %422 = vmatprep.subr.mxu0 0.0
    %423 = vmatpush1.msra.mxu0 0.0
    %424 = vmatprep.subr.mxu0 0.0
    %425 = vmatpush1.msra.mxu0 0.0
    %426 = vmatprep.subr.mxu0 0.0
    %427 = vmatpush1.msra.mxu0 0.0
    %428 = vmatprep.subr.mxu0 0.0
    %429 = vmatpush1.msra.mxu0 0.0
    %430 = vmatprep.subr.mxu0 0.0
    %431 = vmatpush1.msra.mxu0 0.0
    %432 = vmatprep.subr.mxu0 0.0
    %433 = vmatpush1.msra.mxu0 0.0
    %434 = vmatprep.subr.mxu0 0.0
    %435 = vmatpush1.msra.mxu0 0.0
    %436 = vmatprep.subr.mxu0 0.0
    %437 = vmatpush1.msra.mxu0 0.0
    %438 = vmatprep.subr.mxu0 0.0
    %439 = vmatpush1.msra.mxu0 0.0
    %440 = vmatprep.subr.mxu0 0.0
    %441 = vmatpush1.msra.mxu0 0.0
    %442 = vmatprep.subr.mxu0 0.0
    %443 = vmatpush1.msra.mxu0 0.0
    %444 = vmatprep.subr.mxu0 0.0
    %445 = vmatpush1.msra.mxu0 0.0
    %446 = vmatprep.subr.mxu0 0.0
    %447 = vmatpush1.msra.mxu0 0.0
    %448 = vmatprep.subr.mxu0 0.0
    %449 = vmatpush1.msra.mxu0 0.0
    %450 = vmatprep.subr.mxu0 0.0
    %451 = vmatpush1.msra.mxu0 0.0
    %452 = vmatprep.subr.mxu0 0.0
    %453 = vmatpush1.msra.mxu0 0.0
    %454 = vmatprep.subr.mxu0 0.0
    %455 = vmatpush1.msra.mxu0 0.0
    %456 = vmatprep.subr.mxu0 0.0
    %457 = vmatpush1.msra.mxu0 0.0
    %458 = vmatprep.subr.mxu0 0.0
    %459 = vmatpush1.msra.mxu0 0.0
    %460 = vmatprep.subr.mxu0 0.0
    %461 = vmatpush1.msra.mxu0 0.0
    %462 = vmatprep.mubr.f32.mxu0 0.0
    %463 = vmatmul.mubr.f32.gmra.mrb[0].mxu0 %v396
    %v464 = vpop.f32.mrb[0].mxu0
    %v465 = vadd.f32 0.0, %v464
    %v466 = vpop.f32.mrb[0].mxu0
    %467 = vdwg.mxu0
    %v468 = vadd.f32 %v359, %v465
    %469 = vset.pattern.permute.xlu0 2
    %470 = vperm.xlu0 %469, %v238
    %v471 = vpop.permute.xlu0 %470
    %473 = vset.pattern.permute.xlu0 2
    %474 = vperm.xlu0 %473, %v239
    %v475 = vpop.permute.xlu0 %474
    %v477 = vmul.f32 %v471, %v23
    %v478 = vmul.f32 %v475, %v24
    %v479 = vsel %vm33, %v477, 0.0
    %v480 = vrot.slane %v479, 4
    %v481 = vadd.f32 %v479, %v480
    %v482 = vrot.slane %v481, 2
    %v483 = vadd.f32 %v481, %v482
    %v484 = vrot.slane %v483, 1
    %v485 = vadd.f32 %v483, %v484
    %v486 = vsel %vm33, %v478, 0.0
    %v487 = vrot.slane %v486, 4
    %v488 = vadd.f32 %v486, %v487
    %v489 = vrot.slane %v488, 2
    %v490 = vadd.f32 %v488, %v489
    %v491 = vrot.slane %v490, 1
    %v492 = vadd.f32 %v490, %v491
    %s493 = scalar_lea.vmem %s3, 128
    %v494 = vld [vmem:[%s493] sm:$0xff]
    %v495 = vld [vmem:[%s493 + $0x8] sm:$0xff]
    %v496 = vld [vmem:[%s493 + $0x10] sm:$0xff]
    %v497 = vld [vmem:[%s493 + $0x18] sm:$0xff]
    %v498 = vld [vmem:[%s493 + $0x20] sm:$0xff]
    %v499 = vld [vmem:[%s493 + $0x28] sm:$0xff]
    %v500 = vld [vmem:[%s493 + $0x30] sm:$0xff]
    %v501 = vld [vmem:[%s493 + $0x38] sm:$0xff]
    %v504 = vsel %vm279, %v492, %v485
    %v505 = vsel %vm33, %v504, 0
    %507 = vmatprep.subr.mxu0 0.0
    %508 = vmatpush1.msra.mxu0 %v494
    %509 = vmatprep.subr.mxu0 0.0
    %510 = vmatpush1.msra.mxu0 %v495
    %511 = vmatprep.subr.mxu0 0.0
    %512 = vmatpush1.msra.mxu0 %v496
    %513 = vmatprep.subr.mxu0 0.0
    %514 = vmatpush1.msra.mxu0 %v497
    %515 = vmatprep.subr.mxu0 0.0
    %516 = vmatpush1.msra.mxu0 %v498
    %517 = vmatprep.subr.mxu0 0.0
    %518 = vmatpush1.msra.mxu0 %v499
    %519 = vmatprep.subr.mxu0 0.0
    %520 = vmatpush1.msra.mxu0 %v500
    %521 = vmatprep.subr.mxu0 0.0
    %522 = vmatpush1.msra.mxu0 %v501
    %523 = vmatprep.subr.mxu0 0.0
    %524 = vmatpush1.msra.mxu0 0.0
    %525 = vmatprep.subr.mxu0 0.0
    %526 = vmatpush1.msra.mxu0 0.0
    %527 = vmatprep.subr.mxu0 0.0
    %528 = vmatpush1.msra.mxu0 0.0
    %529 = vmatprep.subr.mxu0 0.0
    %530 = vmatpush1.msra.mxu0 0.0
    %531 = vmatprep.subr.mxu0 0.0
    %532 = vmatpush1.msra.mxu0 0.0
    %533 = vmatprep.subr.mxu0 0.0
    %534 = vmatpush1.msra.mxu0 0.0
    %535 = vmatprep.subr.mxu0 0.0
    %536 = vmatpush1.msra.mxu0 0.0
    %537 = vmatprep.subr.mxu0 0.0
    %538 = vmatpush1.msra.mxu0 0.0
    %539 = vmatprep.subr.mxu0 0.0
    %540 = vmatpush1.msra.mxu0 0.0
    %541 = vmatprep.subr.mxu0 0.0
    %542 = vmatpush1.msra.mxu0 0.0
    %543 = vmatprep.subr.mxu0 0.0
    %544 = vmatpush1.msra.mxu0 0.0
    %545 = vmatprep.subr.mxu0 0.0
    %546 = vmatpush1.msra.mxu0 0.0
    %547 = vmatprep.subr.mxu0 0.0
    %548 = vmatpush1.msra.mxu0 0.0
    %549 = vmatprep.subr.mxu0 0.0
    %550 = vmatpush1.msra.mxu0 0.0
    %551 = vmatprep.subr.mxu0 0.0
    %552 = vmatpush1.msra.mxu0 0.0
    %553 = vmatprep.subr.mxu0 0.0
    %554 = vmatpush1.msra.mxu0 0.0
    %555 = vmatprep.subr.mxu0 0.0
    %556 = vmatpush1.msra.mxu0 0.0
    %557 = vmatprep.subr.mxu0 0.0
    %558 = vmatpush1.msra.mxu0 0.0
    %559 = vmatprep.subr.mxu0 0.0
    %560 = vmatpush1.msra.mxu0 0.0
    %561 = vmatprep.subr.mxu0 0.0
    %562 = vmatpush1.msra.mxu0 0.0
    %563 = vmatprep.subr.mxu0 0.0
    %564 = vmatpush1.msra.mxu0 0.0
    %565 = vmatprep.subr.mxu0 0.0
    %566 = vmatpush1.msra.mxu0 0.0
    %567 = vmatprep.subr.mxu0 0.0
    %568 = vmatpush1.msra.mxu0 0.0
    %569 = vmatprep.subr.mxu0 0.0
    %570 = vmatpush1.msra.mxu0 0.0
    %571 = vmatprep.mubr.f32.mxu0 0.0
    %572 = vmatmul.mubr.f32.gmra.mrb[0].mxu0 %v505
    %v573 = vpop.f32.mrb[0].mxu0
    %v574 = vadd.f32 0.0, %v573
    %v575 = vpop.f32.mrb[0].mxu0
    %576 = vdwg.mxu0
    %v577 = vadd.f32 %v468, %v574
    %578 = vset.pattern.permute.xlu0 3
    %579 = vperm.xlu0 %578, %v238
    %v580 = vpop.permute.xlu0 %579
    %582 = vset.pattern.permute.xlu0 3
    %583 = vperm.xlu0 %582, %v239
    %v584 = vpop.permute.xlu0 %583
    %v586 = vmul.f32 %v580, %v23
    %v587 = vmul.f32 %v584, %v24
    %v588 = vsel %vm33, %v586, 0.0
    %v589 = vrot.slane %v588, 4
    %v590 = vadd.f32 %v588, %v589
    %v591 = vrot.slane %v590, 2
    %v592 = vadd.f32 %v590, %v591
    %v593 = vrot.slane %v592, 1
    %v594 = vadd.f32 %v592, %v593
    %v595 = vsel %vm33, %v587, 0.0
    %v596 = vrot.slane %v595, 4
    %v597 = vadd.f32 %v595, %v596
    %v598 = vrot.slane %v597, 2
    %v599 = vadd.f32 %v597, %v598
    %v600 = vrot.slane %v599, 1
    %v601 = vadd.f32 %v599, %v600
    %s602 = scalar_lea.vmem %s3, 192
    %v603 = vld [vmem:[%s602] sm:$0xff]
    %v604 = vld [vmem:[%s602 + $0x8] sm:$0xff]
    %v605 = vld [vmem:[%s602 + $0x10] sm:$0xff]
    %v606 = vld [vmem:[%s602 + $0x18] sm:$0xff]
    %v607 = vld [vmem:[%s602 + $0x20] sm:$0xff]
    %v608 = vld [vmem:[%s602 + $0x28] sm:$0xff]
    %v609 = vld [vmem:[%s602 + $0x30] sm:$0xff]
    %v610 = vld [vmem:[%s602 + $0x38] sm:$0xff]
    %v613 = vsel %vm279, %v601, %v594
    %v614 = vsel %vm33, %v613, 0
    %616 = vmatprep.subr.mxu0 0.0
    %617 = vmatpush1.msra.mxu0 %v603
    %618 = vmatprep.subr.mxu0 0.0
    %619 = vmatpush1.msra.mxu0 %v604
    %620 = vmatprep.subr.mxu0 0.0
    %621 = vmatpush1.msra.mxu0 %v605
    %622 = vmatprep.subr.mxu0 0.0
    %623 = vmatpush1.msra.mxu0 %v606
    %624 = vmatprep.subr.mxu0 0.0
    %625 = vmatpush1.msra.mxu0 %v607
    %626 = vmatprep.subr.mxu0 0.0
    %627 = vmatpush1.msra.mxu0 %v608
    %628 = vmatprep.subr.mxu0 0.0
    %629 = vmatpush1.msra.mxu0 %v609
    %630 = vmatprep.subr.mxu0 0.0
    %631 = vmatpush1.msra.mxu0 %v610
    %632 = vmatprep.subr.mxu0 0.0
    %633 = vmatpush1.msra.mxu0 0.0
    %634 = vmatprep.subr.mxu0 0.0
    %635 = vmatpush1.msra.mxu0 0.0
    %636 = vmatprep.subr.mxu0 0.0
    %637 = vmatpush1.msra.mxu0 0.0
    %638 = vmatprep.subr.mxu0 0.0
    %639 = vmatpush1.msra.mxu0 0.0
    %640 = vmatprep.subr.mxu0 0.0
    %641 = vmatpush1.msra.mxu0 0.0
    %642 = vmatprep.subr.mxu0 0.0
    %643 = vmatpush1.msra.mxu0 0.0
    %644 = vmatprep.subr.mxu0 0.0
    %645 = vmatpush1.msra.mxu0 0.0
    %646 = vmatprep.subr.mxu0 0.0
    %647 = vmatpush1.msra.mxu0 0.0
    %648 = vmatprep.subr.mxu0 0.0
    %649 = vmatpush1.msra.mxu0 0.0
    %650 = vmatprep.subr.mxu0 0.0
    %651 = vmatpush1.msra.mxu0 0.0
    %652 = vmatprep.subr.mxu0 0.0
    %653 = vmatpush1.msra.mxu0 0.0
    %654 = vmatprep.subr.mxu0 0.0
    %655 = vmatpush1.msra.mxu0 0.0
    %656 = vmatprep.subr.mxu0 0.0
    %657 = vmatpush1.msra.mxu0 0.0
    %658 = vmatprep.subr.mxu0 0.0
    %659 = vmatpush1.msra.mxu0 0.0
    %660 = vmatprep.subr.mxu0 0.0
    %661 = vmatpush1.msra.mxu0 0.0
    %662 = vmatprep.subr.mxu0 0.0
    %663 = vmatpush1.msra.mxu0 0.0
    %664 = vmatprep.subr.mxu0 0.0
    %665 = vmatpush1.msra.mxu0 0.0
    %666 = vmatprep.subr.mxu0 0.0
    %667 = vmatpush1.msra.mxu0 0.0
    %668 = vmatprep.subr.mxu0 0.0
    %669 = vmatpush1.msra.mxu0 0.0
    %670 = vmatprep.subr.mxu0 0.0
    %671 = vmatpush1.msra.mxu0 0.0
    %672 = vmatprep.subr.mxu0 0.0
    %673 = vmatpush1.msra.mxu0 0.0
    %674 = vmatprep.subr.mxu0 0.0
    %675 = vmatpush1.msra.mxu0 0.0
    %676 = vmatprep.subr.mxu0 0.0
    %677 = vmatpush1.msra.mxu0 0.0
    %678 = vmatprep.subr.mxu0 0.0
    %679 = vmatpush1.msra.mxu0 0.0
    %680 = vmatprep.mubr.f32.mxu0 0.0
    %681 = vmatmul.mubr.f32.gmra.mrb[0].mxu0 %v614
    %v682 = vpop.f32.mrb[0].mxu0
    %v683 = vadd.f32 0.0, %v682
    %v684 = vpop.f32.mrb[0].mxu0
    %685 = vdwg.mxu0
    %v686 = vadd.f32 %v577, %v683
    %vm687 = vcmask 58368
    %688 = vst.msk [vmem:[#allocation2] sm:$0x3] %vm687, %v686
    // Predicated region
    $region22: #{self_attn_series_lstm_forward.3} parent=1 // pred_check
      _
    $region23: #{self_attn_series_lstm_forward.3} parent=1 // pred_check_branch
      %690 = sbr.rel (0) target = $region25
    $region24: #{self_attn_series_lstm_forward.3} parent=1 // pred_region
      %s692 = ssub.s32 32, 32
      %693 = vsyncadd [#allocation3], %s692
      %s695 = sshll.u32 [#allocation2], 4
      %s696 = int_to_ptr.vmem [resolvable:$true] %s695
      %698 = dma.vmem_to_hbm [thread:$0]  %s696, 32, %s5, [#allocation3]
    $region25: #{self_attn_series_lstm_forward.3} parent=1 // pred_fallthru
      _
    // Predicated region
    $region26: #{self_attn_series_lstm_forward.3} parent=1 // pred_check
      _
    $region27: #{self_attn_series_lstm_forward.3} parent=1 // pred_check_branch
      %700 = sbr.rel (0) target = $region29
    $region28: #{self_attn_series_lstm_forward.3} parent=1 // pred_region
      _
    $region29: #{self_attn_series_lstm_forward.3} parent=1 // pred_fallthru
      _
    // Predicated region
    $region30: #{self_attn_series_lstm_forward.3} parent=1 // pred_check
      _
    $region31: #{self_attn_series_lstm_forward.3} parent=1 // pred_check_branch
      %702 = sbr.rel (0) target = $region33
    $region32: #{self_attn_series_lstm_forward.3} parent=1 // pred_region
      %703 = dma.done [#allocation3], 32
    $region33: #{self_attn_series_lstm_forward.3} parent=1 // pred_fallthru
      _
    // Predicated region
    $region34: #{self_attn_series_lstm_forward.3} parent=1 // pred_check
      _
    $region35: #{self_attn_series_lstm_forward.3} parent=1 // pred_check_branch
      %705 = sbr.rel (0) target = $region37
    $region36: #{self_attn_series_lstm_forward.3} parent=1 // pred_region
      _
    $region37: #{self_attn_series_lstm_forward.3} parent=1 // pred_fallthru
      _
    %706 = vsyncpa [#allocation3], 1

// kernel: self_attn_series_lstm_forward.2
$region0: #{self_attn_series_lstm_forward.2}
  #allocation0 [shape = 'u32[]', space=smem, size = 0x4, offset = 0x4, fixed_abs, tag = 'smem constant byte address 0x4 - core index']
  #allocation1 [shape = 'u32[144,128]{1,0:T(1,128)}', space=vmem, size = 0x12000, scoped, tag = 'internal scratch']
  %s0 = inlined_call_operand.hbm [shape: f32[2,8,16], index: 0, kind: input, shape index: {}]
  %s1 = inlined_call_operand.hbm [shape: f32[16,256], index: 1, kind: input, shape index: {}]
  %s2 = inlined_call_operand.hbm [shape: f32[64,256], index: 2, kind: input, shape index: {}]
  %s3 = inlined_call_operand.vmem [shape: f32[1,256], index: 3, kind: input, shape index: {}]
  %s4 = inlined_call_operand.vmem [shape: f32[2,8,64], index: 4, kind: output, shape index: {}]
  %s5 = sld [smem:[#allocation0]]
  $region38: #{self_attn_series_lstm_forward.2} parent=0
    _
  %s7 = ssub.s32 1, %s5
  %s8 = scalar_select 0, %s7, %s5
  $region1: #{self_attn_series_lstm_forward.2} parent=0
    #allocation2 [shape = 'u8[8192]{0}', space=vmem, size = 0x2000, scoped, tag = 'input window, operand 0, single buffered']
    #allocation3 [shape = 's32[1]{0}', space=sflag, size = 0x4, scoped, tag = 'scoped memory for self_attn_series_lstm_forward.2']
    #allocation4 [shape = 'u8[16384]{0}', space=vmem, size = 0x4000, scoped, tag = 'input window, operand 1, single buffered']
    #allocation5 [shape = 's32[1]{0}', space=sflag, size = 0x4, scoped, tag = 'scoped memory for self_attn_series_lstm_forward.2']
    #allocation6 [shape = 'u8[65536]{0}', space=vmem, size = 0x10000, scoped, tag = 'input window, operand 2, single buffered']
    %9 = vsyncpa [#allocation3], 0
    %10 = vsyncpa [#allocation5], 0
    // Predicated region
    $region2: #{self_attn_series_lstm_forward.2} parent=1 // pred_check
      _
    $region3: #{self_attn_series_lstm_forward.2} parent=1 // pred_check_branch
      %12 = sbr.rel (0) target = $region5
    $region4: #{self_attn_series_lstm_forward.2} parent=1 // pred_region
      %s14 = ssub.s32 256, 256
      %15 = vsyncadd [#allocation3], %s14
      %s16 = sshll.u32 [#allocation2], 4
      %s17 = int_to_ptr.vmem [resolvable:$true] %s16
      %22 = dma.hbm_to_vmem [thread:$0]  %s0, 256, %s17, [#allocation3], 128, 128, 8
    $region5: #{self_attn_series_lstm_forward.2} parent=1 // pred_fallthru
      _
    // Predicated region
    $region6: #{self_attn_series_lstm_forward.2} parent=1 // pred_check
      _
    $region7: #{self_attn_series_lstm_forward.2} parent=1 // pred_check_branch
      %24 = sbr.rel (0) target = $region9
    $region8: #{self_attn_series_lstm_forward.2} parent=1 // pred_region
      %s26 = ssub.s32 512, 512
      %27 = vsyncadd [#allocation5], %s26
      %s28 = sshll.u32 [#allocation4], 4
      %s29 = int_to_ptr.vmem [resolvable:$true] %s28
      %34 = dma.hbm_to_vmem [thread:$0]  %s1, 512, %s29, [#allocation5], 256, 256, 16
    $region9: #{self_attn_series_lstm_forward.2} parent=1 // pred_fallthru
      _
    // Predicated region
    $region10: #{self_attn_series_lstm_forward.2} parent=1 // pred_check
      _
    $region11: #{self_attn_series_lstm_forward.2} parent=1 // pred_check_branch
      %36 = sbr.rel (0) target = $region13
    $region12: #{self_attn_series_lstm_forward.2} parent=1 // pred_region
      %s38 = ssub.s32 2048, 2048
      %39 = vsyncadd [#allocation5], %s38
      %s40 = sshll.u32 [#allocation6], 4
      %s41 = int_to_ptr.vmem [resolvable:$true] %s40
      %46 = dma.hbm_to_vmem [thread:$0]  %s2, 2048, %s41, [#allocation5], 256, 256, 16
    $region13: #{self_attn_series_lstm_forward.2} parent=1 // pred_fallthru
      _
    // Predicated region
    $region14: #{self_attn_series_lstm_forward.2} parent=1 // pred_check
      _
    $region15: #{self_attn_series_lstm_forward.2} parent=1 // pred_check_branch
      %48 = sbr.rel (0) target = $region17
    $region16: #{self_attn_series_lstm_forward.2} parent=1 // pred_region
      _
    $region17: #{self_attn_series_lstm_forward.2} parent=1 // pred_fallthru
      _
    // Predicated region
    $region18: #{self_attn_series_lstm_forward.2} parent=1 // pred_check
      _
    $region19: #{self_attn_series_lstm_forward.2} parent=1 // pred_check_branch
      %50 = sbr.rel (0) target = $region21
    $region20: #{self_attn_series_lstm_forward.2} parent=1 // pred_region
      %51 = dma.done [#allocation3], 256
    $region21: #{self_attn_series_lstm_forward.2} parent=1 // pred_fallthru
      _
    // Predicated region
    $region22: #{self_attn_series_lstm_forward.2} parent=1 // pred_check
      _
    $region23: #{self_attn_series_lstm_forward.2} parent=1 // pred_check_branch
      %53 = sbr.rel (0) target = $region25
    $region24: #{self_attn_series_lstm_forward.2} parent=1 // pred_region
      %54 = dma.done [#allocation5], 512
    $region25: #{self_attn_series_lstm_forward.2} parent=1 // pred_fallthru
      _
    // Predicated region
    $region26: #{self_attn_series_lstm_forward.2} parent=1 // pred_check
      _
    $region27: #{self_attn_series_lstm_forward.2} parent=1 // pred_check_branch
      %56 = sbr.rel (0) target = $region29
    $region28: #{self_attn_series_lstm_forward.2} parent=1 // pred_region
      %57 = dma.done [#allocation5], 2048
    $region29: #{self_attn_series_lstm_forward.2} parent=1 // pred_fallthru
      _
    %v58 = vld [vmem:[#allocation2] sm:$0xff]
    %v59 = vld [vmem:[#allocation2 + $0x8] sm:$0xff]
    %v60 = vld [vmem:[#allocation4] sm:$0xff]
    %v61 = vld [vmem:[#allocation4 + $0x8] sm:$0xff]
    %v62 = vld [vmem:[#allocation4 + $0x10] sm:$0xff]
    %v63 = vld [vmem:[#allocation4 + $0x18] sm:$0xff]
    %v64 = vld [vmem:[%s3] sm:$0x3]
    %v66 = vlaneseq
    %v67 = vshrl.u32 %v66, 7
    %v68 = vsub.s32 0, %v67
    %v69 = vrot.slane %v64, %v68
    %v70 = vlaneseq
    %v71 = vshrl.u32 %v70, 7
    %v72 = vsub.s32 1, %v71
    %v73 = vrot.slane %v64, %v72
    %vm76 = vcmask 130048
    %v78 = vsel %vm76, %v58, 0
    %v81 = vsel %vm76, %v59, 0
    %83 = vmatprep.subr.mxu0 %v61
    %84 = vmatpush1.msra.mxu0 %v60
    %85 = vmatprep.subr.mxu0 %v63
    %86 = vmatpush1.msra.mxu0 %v62
    %87 = vmatprep.subr.mxu0 0.0
    %88 = vmatpush1.msra.mxu0 0.0
    %89 = vmatprep.subr.mxu0 0.0
    %90 = vmatpush1.msra.mxu0 0.0
    %91 = vmatprep.subr.mxu0 0.0
    %92 = vmatpush1.msra.mxu0 0.0
    %93 = vmatprep.subr.mxu0 0.0
    %94 = vmatpush1.msra.mxu0 0.0
    %95 = vmatprep.subr.mxu0 0.0
    %96 = vmatpush1.msra.mxu0 0.0
    %97 = vmatprep.subr.mxu0 0.0
    %98 = vmatpush1.msra.mxu0 0.0
    %99 = vmatprep.subr.mxu0 0.0
    %100 = vmatpush1.msra.mxu0 0.0
    %101 = vmatprep.subr.mxu0 0.0
    %102 = vmatpush1.msra.mxu0 0.0
    %103 = vmatprep.subr.mxu0 0.0
    %104 = vmatpush1.msra.mxu0 0.0
    %105 = vmatprep.subr.mxu0 0.0
    %106 = vmatpush1.msra.mxu0 0.0
    %107 = vmatprep.subr.mxu0 0.0
    %108 = vmatpush1.msra.mxu0 0.0
    %109 = vmatprep.subr.mxu0 0.0
    %110 = vmatpush1.msra.mxu0 0.0
    %111 = vmatprep.subr.mxu0 0.0
    %112 = vmatpush1.msra.mxu0 0.0
    %113 = vmatprep.subr.mxu0 0.0
    %114 = vmatpush1.msra.mxu0 0.0
    %115 = vmatprep.subr.mxu0 0.0
    %116 = vmatpush1.msra.mxu0 0.0
    %117 = vmatprep.subr.mxu0 0.0
    %118 = vmatpush1.msra.mxu0 0.0
    %119 = vmatprep.subr.mxu0 0.0
    %120 = vmatpush1.msra.mxu0 0.0
    %121 = vmatprep.subr.mxu0 0.0
    %122 = vmatpush1.msra.mxu0 0.0
    %123 = vmatprep.subr.mxu0 0.0
    %124 = vmatpush1.msra.mxu0 0.0
    %125 = vmatprep.subr.mxu0 0.0
    %126 = vmatpush1.msra.mxu0 0.0
    %127 = vmatprep.subr.mxu0 0.0
    %128 = vmatpush1.msra.mxu0 0.0
    %129 = vmatprep.subr.mxu0 0.0
    %130 = vmatpush1.msra.mxu0 0.0
    %131 = vmatprep.subr.mxu0 0.0
    %132 = vmatpush1.msra.mxu0 0.0
    %133 = vmatprep.subr.mxu0 0.0
    %134 = vmatpush1.msra.mxu0 0.0
    %135 = vmatprep.subr.mxu0 0.0
    %136 = vmatpush1.msra.mxu0 0.0
    %137 = vmatprep.subr.mxu0 0.0
    %138 = vmatpush1.msra.mxu0 0.0
    %139 = vmatprep.subr.mxu0 0.0
    %140 = vmatpush1.msra.mxu0 0.0
    %141 = vmatprep.subr.mxu0 0.0
    %142 = vmatpush1.msra.mxu0 0.0
    %143 = vmatprep.subr.mxu0 0.0
    %144 = vmatpush1.msra.mxu0 0.0
    %145 = vmatprep.subr.mxu0 0.0
    %146 = vmatpush1.msra.mxu0 0.0
    %147 = vmatprep.mubr.f32.mxu0 0.0
    %148 = vmatmul.mubr.f32.gmra.mrb[0].mxu0 %v78
    %v149 = vpop.f32.mrb[0].mxu0
    %v150 = vadd.f32 %v69, %v149
    %v151 = vpop.f32.mrb[0].mxu0
    %v152 = vadd.f32 %v73, %v151
    %153 = vmatprep.mubr.f32.mxu0 0.0
    %154 = vmatmul.mubr.f32.gmra.mrb[0].mxu0 %v81
    %v155 = vpop.f32.mrb[0].mxu0
    %v156 = vadd.f32 %v69, %v155
    %v157 = vpop.f32.mrb[0].mxu0
    %v158 = vadd.f32 %v73, %v157
    %159 = vdwg.mxu0
    %v160 = vlaneseq
    %v161 = vand.u32 %v160, 127
    %v162 = vadd.s32 %v161, 128
    %vm163 = vcmp.ge.s32.totalorder %v161, 128
    %vm164 = vcmp.ge.s32.totalorder %v162, 128
    %vm165 = vcmp.lt.s32.totalorder %v161, 192
    %vm166 = vcmp.lt.s32.totalorder %v162, 192
    %vm167 = vmand %vm163, %vm165
    %vm168 = vmand %vm164, %vm166
    %vm169 = vcmp.lt.s32.totalorder %v161, 0
    %v170 = vsub.s32 0, %v161
    %v171 = vsel %vm169, %v170, %v161
    %v172 = vshrl.u32 %v171, 6
    %v173 = vand.u32 %v171, 63
    %v174 = vsub.s32 0, %v173
    %v175 = vsel %vm169, %v174, %v173
    %vm176 = vcmp.lt.s32.totalorder %v162, 0
    %v177 = vsub.s32 0, %v162
    %v178 = vsel %vm176, %v177, %v162
    %v179 = vshrl.u32 %v178, 6
    %v180 = vand.u32 %v178, 63
    %v181 = vsub.s32 0, %v180
    %v182 = vsel %vm176, %v181, %v180
    %vm183 = vcmp.ne.s32.totalorder %v175, 0
    %vm184 = vcmp.ne.s32.totalorder %v182, 0
    %vm185 = vcmp.lt.s32.totalorder %v175, 0
    %vm186 = vcmp.lt.s32.totalorder %v182, 0
    %vm187 = vmand %vm185, %vm183
    %vm188 = vmand %vm186, %vm184
    %v189 = vadd.s32 %v175, 64
    %v190 = vadd.s32 %v182, 64
    %v191 = vsel %vm187, %v189, %v175
    %v192 = vsel %vm188, %v190, %v182
    %vm193 = vcmp.ge.s32.totalorder %v191, 32
    %vm194 = vcmp.ge.s32.totalorder %v192, 32
    %v195 = vld [vmem:[#allocation6] sm:$0xff]
    %v196 = vld [vmem:[#allocation6 + $0x8] sm:$0xff]
    %v197 = vld [vmem:[#allocation6 + $0x10] sm:$0xff]
    %v198 = vld [vmem:[#allocation6 + $0x18] sm:$0xff]
    %v199 = vld [vmem:[#allocation6 + $0x20] sm:$0xff]
    %v200 = vld [vmem:[#allocation6 + $0x28] sm:$0xff]
    %v201 = vld [vmem:[#allocation6 + $0x30] sm:$0xff]
    %v202 = vld [vmem:[#allocation6 + $0x38] sm:$0xff]
    %v203 = vld [vmem:[#allocation6 + $0x40] sm:$0xff]
    %v204 = vld [vmem:[#allocation6 + $0x48] sm:$0xff]
    %v205 = vld [vmem:[#allocation6 + $0x50] sm:$0xff]
    %v206 = vld [vmem:[#allocation6 + $0x58] sm:$0xff]
    %v207 = vld [vmem:[#allocation6 + $0x60] sm:$0xff]
    %v208 = vld [vmem:[#allocation6 + $0x68] sm:$0xff]
    %v209 = vld [vmem:[#allocation6 + $0x70] sm:$0xff]
    %v210 = vld [vmem:[#allocation6 + $0x78] sm:$0xff]
    %v215 = vrot.slane %v150, 7
    %v216 = vrot.slane %v156, 6
    %vm217 = vcmask 1041409
    %v218 = vsel %vm217, %v216, %v215
    %v219 = vrot.slane %v152, 7
    %v220 = vrot.slane %v158, 6
    %v221 = vsel %vm217, %v220, %v219
    %v224 = vrot.slane %v156, 7
    %v225 = vsel %vm217, %v224, %v150
    %v226 = vrot.slane %v158, 7
    %v227 = vsel %vm217, %v226, %v152
    %v230 = vsel %vm193, %v218, %v225
    %v231 = vsel %vm194, %v221, %v227
    %vm232 = vcmask 523264
    %v234 = vsel %vm232, 0.0, 0
    %236 = vmatprep.subr.mxu0 %v196
    %237 = vmatpush1.msra.mxu0 %v195
    %238 = vmatprep.subr.mxu0 %v198
    %239 = vmatpush1.msra.mxu0 %v197
    %240 = vmatprep.subr.mxu0 %v200
    %241 = vmatpush1.msra.mxu0 %v199
    %242 = vmatprep.subr.mxu0 %v202
    %243 = vmatpush1.msra.mxu0 %v201
    %244 = vmatprep.subr.mxu0 %v204
    %245 = vmatpush1.msra.mxu0 %v203
    %246 = vmatprep.subr.mxu0 %v206
    %247 = vmatpush1.msra.mxu0 %v205
    %248 = vmatprep.subr.mxu0 %v208
    %249 = vmatpush1.msra.mxu0 %v207
    %250 = vmatprep.subr.mxu0 %v210
    %251 = vmatpush1.msra.mxu0 %v209
    %252 = vmatprep.subr.mxu0 0.0
    %253 = vmatpush1.msra.mxu0 0.0
    %254 = vmatprep.subr.mxu0 0.0
    %255 = vmatpush1.msra.mxu0 0.0
    %256 = vmatprep.subr.mxu0 0.0
    %257 = vmatpush1.msra.mxu0 0.0
    %258 = vmatprep.subr.mxu0 0.0
    %259 = vmatpush1.msra.mxu0 0.0
    %260 = vmatprep.subr.mxu0 0.0
    %261 = vmatpush1.msra.mxu0 0.0
    %262 = vmatprep.subr.mxu0 0.0
    %263 = vmatpush1.msra.mxu0 0.0
    %264 = vmatprep.subr.mxu0 0.0
    %265 = vmatpush1.msra.mxu0 0.0
    %266 = vmatprep.subr.mxu0 0.0
    %267 = vmatpush1.msra.mxu0 0.0
    %268 = vmatprep.subr.mxu0 0.0
    %269 = vmatpush1.msra.mxu0 0.0
    %270 = vmatprep.subr.mxu0 0.0
    %271 = vmatpush1.msra.mxu0 0.0
    %272 = vmatprep.subr.mxu0 0.0
    %273 = vmatpush1.msra.mxu0 0.0
    %274 = vmatprep.subr.mxu0 0.0
    %275 = vmatpush1.msra.mxu0 0.0
    %276 = vmatprep.subr.mxu0 0.0
    %277 = vmatpush1.msra.mxu0 0.0
    %278 = vmatprep.subr.mxu0 0.0
    %279 = vmatpush1.msra.mxu0 0.0
    %280 = vmatprep.subr.mxu0 0.0
    %281 = vmatpush1.msra.mxu0 0.0
    %282 = vmatprep.subr.mxu0 0.0
    %283 = vmatpush1.msra.mxu0 0.0
    %284 = vmatprep.subr.mxu0 0.0
    %285 = vmatpush1.msra.mxu0 0.0
    %286 = vmatprep.subr.mxu0 0.0
    %287 = vmatpush1.msra.mxu0 0.0
    %288 = vmatprep.subr.mxu0 0.0
    %289 = vmatpush1.msra.mxu0 0.0
    %290 = vmatprep.subr.mxu0 0.0
    %291 = vmatpush1.msra.mxu0 0.0
    %292 = vmatprep.subr.mxu0 0.0
    %293 = vmatpush1.msra.mxu0 0.0
    %294 = vmatprep.subr.mxu0 0.0
    %295 = vmatpush1.msra.mxu0 0.0
    %296 = vmatprep.subr.mxu0 0.0
    %297 = vmatpush1.msra.mxu0 0.0
    %298 = vmatprep.subr.mxu0 0.0
    %299 = vmatpush1.msra.mxu0 0.0
    %300 = vmatprep.mubr.f32.mxu0 0.0
    %301 = vmatmul.mubr.f32.gmra.mrb[0].mxu0 %v234
    %v302 = vpop.f32.mrb[0].mxu0
    %v303 = vadd.f32 0.0, %v302
    %v304 = vpop.f32.mrb[0].mxu0
    %v305 = vadd.f32 0.0, %v304
    %306 = vdwg.mxu0
    %v307 = vadd.f32 %v230, %v303
    %v308 = vadd.f32 %v231, %v305
    %v309 = vtanh.pop %v307
    %v310 = vtanh.pop %v308
    %v311 = vxor.u32 %v307, 2147483648
    %v312 = vxor.u32 %v308, 2147483648
    %v313 = vmul.f32 %v311, 1.442695
    %v314 = vpow.pop %v313
    %v315 = vmul.f32 %v312, 1.442695
    %v316 = vpow.pop %v315
    %v317 = vadd.f32 %v314, 1.0
    %v318 = vadd.f32 %v316, 1.0
    %v319 = vrcp.pop %v317
    %v320 = vmul.f32 1.0, %v319
    %v321 = vrcp.pop %v318
    %v322 = vmul.f32 1.0, %v321
    %v323 = vsel %vm167, %v309, %v320
    %v324 = vsel %vm168, %v310, %v322
    %v325 = vmul.f32 %v323, 0.0
    %v326 = vmul.f32 %v323, %v324
    %328 = vrot.lane.b32.xlu0 %v326, 64
    %v329 = vpop.permute.xlu0 %328
    %v331 = vadd.f32 %v325, %v329
    %v332 = vtanh.pop %v331
    %v333 = vmul.f32 %v324, %v332
    %v334 = vrot.slane %v150, 6
    %v335 = vrot.slane %v156, 5
    %v336 = vsel %vm217, %v335, %v334
    %v337 = vrot.slane %v152, 6
    %v338 = vrot.slane %v158, 5
    %v339 = vsel %vm217, %v338, %v337
    %v342 = vrot.slane %v150, 1
    %v343 = vsel %vm217, %v156, %v342
    %v344 = vrot.slane %v152, 1
    %v345 = vsel %vm217, %v158, %v344
    %v348 = vsel %vm193, %v336, %v343
    %v349 = vsel %vm194, %v339, %v345
    %351 = vrot.lane.b32.xlu0 %v333, 64
    %v352 = vpop.permute.xlu0 %351
    %v353 = vsel %vm232, %v352, 0
    %355 = vmatprep.subr.mxu0 %v196
    %356 = vmatpush1.msra.mxu0 %v195
    %357 = vmatprep.subr.mxu0 %v198
    %358 = vmatpush1.msra.mxu0 %v197
    %359 = vmatprep.subr.mxu0 %v200
    %360 = vmatpush1.msra.mxu0 %v199
    %361 = vmatprep.subr.mxu0 %v202
    %362 = vmatpush1.msra.mxu0 %v201
    %363 = vmatprep.subr.mxu0 %v204
    %364 = vmatpush1.msra.mxu0 %v203
    %365 = vmatprep.subr.mxu0 %v206
    %366 = vmatpush1.msra.mxu0 %v205
    %367 = vmatprep.subr.mxu0 %v208
    %368 = vmatpush1.msra.mxu0 %v207
    %369 = vmatprep.subr.mxu0 %v210
    %370 = vmatpush1.msra.mxu0 %v209
    %371 = vmatprep.subr.mxu0 0.0
    %372 = vmatpush1.msra.mxu0 0.0
    %373 = vmatprep.subr.mxu0 0.0
    %374 = vmatpush1.msra.mxu0 0.0
    %375 = vmatprep.subr.mxu0 0.0
    %376 = vmatpush1.msra.mxu0 0.0
    %377 = vmatprep.subr.mxu0 0.0
    %378 = vmatpush1.msra.mxu0 0.0
    %379 = vmatprep.subr.mxu0 0.0
    %380 = vmatpush1.msra.mxu0 0.0
    %381 = vmatprep.subr.mxu0 0.0
    %382 = vmatpush1.msra.mxu0 0.0
    %383 = vmatprep.subr.mxu0 0.0
    %384 = vmatpush1.msra.mxu0 0.0
    %385 = vmatprep.subr.mxu0 0.0
    %386 = vmatpush1.msra.mxu0 0.0
    %387 = vmatprep.subr.mxu0 0.0
    %388 = vmatpush1.msra.mxu0 0.0
    %389 = vmatprep.subr.mxu0 0.0
    %390 = vmatpush1.msra.mxu0 0.0
    %391 = vmatprep.subr.mxu0 0.0
    %392 = vmatpush1.msra.mxu0 0.0
    %393 = vmatprep.subr.mxu0 0.0
    %394 = vmatpush1.msra.mxu0 0.0
    %395 = vmatprep.subr.mxu0 0.0
    %396 = vmatpush1.msra.mxu0 0.0
    %397 = vmatprep.subr.mxu0 0.0
    %398 = vmatpush1.msra.mxu0 0.0
    %399 = vmatprep.subr.mxu0 0.0
    %400 = vmatpush1.msra.mxu0 0.0
    %401 = vmatprep.subr.mxu0 0.0
    %402 = vmatpush1.msra.mxu0 0.0
    %403 = vmatprep.subr.mxu0 0.0
    %404 = vmatpush1.msra.mxu0 0.0
    %405 = vmatprep.subr.mxu0 0.0
    %406 = vmatpush1.msra.mxu0 0.0
    %407 = vmatprep.subr.mxu0 0.0
    %408 = vmatpush1.msra.mxu0 0.0
    %409 = vmatprep.subr.mxu0 0.0
    %410 = vmatpush1.msra.mxu0 0.0
    %411 = vmatprep.subr.mxu0 0.0
    %412 = vmatpush1.msra.mxu0 0.0
    %413 = vmatprep.subr.mxu0 0.0
    %414 = vmatpush1.msra.mxu0 0.0
    %415 = vmatprep.subr.mxu0 0.0
    %416 = vmatpush1.msra.mxu0 0.0
    %417 = vmatprep.subr.mxu0 0.0
    %418 = vmatpush1.msra.mxu0 0.0
    %419 = vmatprep.mubr.f32.mxu0 0.0
    %420 = vmatmul.mubr.f32.gmra.mrb[0].mxu0 %v353
    %v421 = vpop.f32.mrb[0].mxu0
    %v422 = vadd.f32 0.0, %v421
    %v423 = vpop.f32.mrb[0].mxu0
    %v424 = vadd.f32 0.0, %v423
    %425 = vdwg.mxu0
    %v426 = vadd.f32 %v348, %v422
    %v427 = vadd.f32 %v349, %v424
    %v428 = vtanh.pop %v426
    %v429 = vtanh.pop %v427
    %v430 = vxor.u32 %v426, 2147483648
    %v431 = vxor.u32 %v427, 2147483648
    %v432 = vmul.f32 %v430, 1.442695
    %v433 = vpow.pop %v432
    %v434 = vmul.f32 %v431, 1.442695
    %v435 = vpow.pop %v434
    %v436 = vadd.f32 %v433, 1.0
    %v437 = vadd.f32 %v435, 1.0
    %v438 = vrcp.pop %v436
    %v439 = vmul.f32 1.0, %v438
    %v440 = vrcp.pop %v437
    %v441 = vmul.f32 1.0, %v440
    %v442 = vsel %vm167, %v428, %v439
    %v443 = vsel %vm168, %v429, %v441
    %v444 = vmul.f32 %v442, %v331
    %v445 = vmul.f32 %v442, %v443
    %447 = vrot.lane.b32.xlu0 %v445, 64
    %v448 = vpop.permute.xlu0 %447
    %v450 = vadd.f32 %v444, %v448
    %v451 = vtanh.pop %v450
    %v452 = vmul.f32 %v443, %v451
    %v453 = vrot.slane %v150, 5
    %v454 = vrot.slane %v156, 4
    %v455 = vsel %vm217, %v454, %v453
    %v456 = vrot.slane %v152, 5
    %v457 = vrot.slane %v158, 4
    %v458 = vsel %vm217, %v457, %v456
    %v461 = vrot.slane %v150, 2
    %v462 = vrot.slane %v156, 1
    %v463 = vsel %vm217, %v462, %v461
    %v464 = vrot.slane %v152, 2
    %v465 = vrot.slane %v158, 1
    %v466 = vsel %vm217, %v465, %v464
    %v469 = vsel %vm193, %v455, %v463
    %v470 = vsel %vm194, %v458, %v466
    %472 = vrot.lane.b32.xlu0 %v452, 64
    %v473 = vpop.permute.xlu0 %472
    %v474 = vsel %vm232, %v473, 0
    %476 = vmatprep.subr.mxu0 %v196
    %477 = vmatpush1.msra.mxu0 %v195
    %478 = vmatprep.subr.mxu0 %v198
    %479 = vmatpush1.msra.mxu0 %v197
    %480 = vmatprep.subr.mxu0 %v200
    %481 = vmatpush1.msra.mxu0 %v199
    %482 = vmatprep.subr.mxu0 %v202
    %483 = vmatpush1.msra.mxu0 %v201
    %484 = vmatprep.subr.mxu0 %v204
    %485 = vmatpush1.msra.mxu0 %v203
    %486 = vmatprep.subr.mxu0 %v206
    %487 = vmatpush1.msra.mxu0 %v205
    %488 = vmatprep.subr.mxu0 %v208
    %489 = vmatpush1.msra.mxu0 %v207
    %490 = vmatprep.subr.mxu0 %v210
    %491 = vmatpush1.msra.mxu0 %v209
    %492 = vmatprep.subr.mxu0 0.0
    %493 = vmatpush1.msra.mxu0 0.0
    %494 = vmatprep.subr.mxu0 0.0
    %495 = vmatpush1.msra.mxu0 0.0
    %496 = vmatprep.subr.mxu0 0.0
    %497 = vmatpush1.msra.mxu0 0.0
    %498 = vmatprep.subr.mxu0 0.0
    %499 = vmatpush1.msra.mxu0 0.0
    %500 = vmatprep.subr.mxu0 0.0
    %501 = vmatpush1.msra.mxu0 0.0
    %502 = vmatprep.subr.mxu0 0.0
    %503 = vmatpush1.msra.mxu0 0.0
    %504 = vmatprep.subr.mxu0 0.0
    %505 = vmatpush1.msra.mxu0 0.0
    %506 = vmatprep.subr.mxu0 0.0
    %507 = vmatpush1.msra.mxu0 0.0
    %508 = vmatprep.subr.mxu0 0.0
    %509 = vmatpush1.msra.mxu0 0.0
    %510 = vmatprep.subr.mxu0 0.0
    %511 = vmatpush1.msra.mxu0 0.0
    %512 = vmatprep.subr.mxu0 0.0
    %513 = vmatpush1.msra.mxu0 0.0
    %514 = vmatprep.subr.mxu0 0.0
    %515 = vmatpush1.msra.mxu0 0.0
    %516 = vmatprep.subr.mxu0 0.0
    %517 = vmatpush1.msra.mxu0 0.0
    %518 = vmatprep.subr.mxu0 0.0
    %519 = vmatpush1.msra.mxu0 0.0
    %520 = vmatprep.subr.mxu0 0.0
    %521 = vmatpush1.msra.mxu0 0.0
    %522 = vmatprep.subr.mxu0 0.0
    %523 = vmatpush1.msra.mxu0 0.0
    %524 = vmatprep.subr.mxu0 0.0
    %525 = vmatpush1.msra.mxu0 0.0
    %526 = vmatprep.subr.mxu0 0.0
    %527 = vmatpush1.msra.mxu0 0.0
    %528 = vmatprep.subr.mxu0 0.0
    %529 = vmatpush1.msra.mxu0 0.0
    %530 = vmatprep.subr.mxu0 0.0
    %531 = vmatpush1.msra.mxu0 0.0
    %532 = vmatprep.subr.mxu0 0.0
    %533 = vmatpush1.msra.mxu0 0.0
    %534 = vmatprep.subr.mxu0 0.0
    %535 = vmatpush1.msra.mxu0 0.0
    %536 = vmatprep.subr.mxu0 0.0
    %537 = vmatpush1.msra.mxu0 0.0
    %538 = vmatprep.subr.mxu0 0.0
    %539 = vmatpush1.msra.mxu0 0.0
    %540 = vmatprep.mubr.f32.mxu0 0.0
    %541 = vmatmul.mubr.f32.gmra.mrb[0].mxu0 %v474
    %v542 = vpop.f32.mrb[0].mxu0
    %v543 = vadd.f32 0.0, %v542
    %v544 = vpop.f32.mrb[0].mxu0
    %v545 = vadd.f32 0.0, %v544
    %546 = vdwg.mxu0
    %v547 = vadd.f32 %v469, %v543
    %v548 = vadd.f32 %v470, %v545
    %v549 = vtanh.pop %v547
    %v550 = vtanh.pop %v548
    %v551 = vxor.u32 %v547, 2147483648
    %v552 = vxor.u32 %v548, 2147483648
    %v553 = vmul.f32 %v551, 1.442695
    %v554 = vpow.pop %v553
    %v555 = vmul.f32 %v552, 1.442695
    %v556 = vpow.pop %v555
    %v557 = vadd.f32 %v554, 1.0
    %v558 = vadd.f32 %v556, 1.0
    %v559 = vrcp.pop %v557
    %v560 = vmul.f32 1.0, %v559
    %v561 = vrcp.pop %v558
    %v562 = vmul.f32 1.0, %v561
    %v563 = vsel %vm167, %v549, %v560
    %v564 = vsel %vm168, %v550, %v562
    %v565 = vmul.f32 %v563, %v450
    %v566 = vmul.f32 %v563, %v564
    %568 = vrot.lane.b32.xlu0 %v566, 64
    %v569 = vpop.permute.xlu0 %568
    %v571 = vadd.f32 %v565, %v569
    %v572 = vtanh.pop %v571
    %v573 = vmul.f32 %v564, %v572
    %v574 = vrot.slane %v150, 4
    %v575 = vrot.slane %v156, 3
    %v576 = vsel %vm217, %v575, %v574
    %v577 = vrot.slane %v152, 4
    %v578 = vrot.slane %v158, 3
    %v579 = vsel %vm217, %v578, %v577
    %v582 = vrot.slane %v150, 3
    %v583 = vrot.slane %v156, 2
    %v584 = vsel %vm217, %v583, %v582
    %v585 = vrot.slane %v152, 3
    %v586 = vrot.slane %v158, 2
    %v587 = vsel %vm217, %v586, %v585
    %v590 = vsel %vm193, %v576, %v584
    %v591 = vsel %vm194, %v579, %v587
    %593 = vrot.lane.b32.xlu0 %v573, 64
    %v594 = vpop.permute.xlu0 %593
    %v595 = vsel %vm232, %v594, 0
    %597 = vmatprep.subr.mxu0 %v196
    %598 = vmatpush1.msra.mxu0 %v195
    %599 = vmatprep.subr.mxu0 %v198
    %600 = vmatpush1.msra.mxu0 %v197
    %601 = vmatprep.subr.mxu0 %v200
    %602 = vmatpush1.msra.mxu0 %v199
    %603 = vmatprep.subr.mxu0 %v202
    %604 = vmatpush1.msra.mxu0 %v201
    %605 = vmatprep.subr.mxu0 %v204
    %606 = vmatpush1.msra.mxu0 %v203
    %607 = vmatprep.subr.mxu0 %v206
    %608 = vmatpush1.msra.mxu0 %v205
    %609 = vmatprep.subr.mxu0 %v208
    %610 = vmatpush1.msra.mxu0 %v207
    %611 = vmatprep.subr.mxu0 %v210
    %612 = vmatpush1.msra.mxu0 %v209
    %613 = vmatprep.subr.mxu0 0.0
    %614 = vmatpush1.msra.mxu0 0.0
    %615 = vmatprep.subr.mxu0 0.0
    %616 = vmatpush1.msra.mxu0 0.0
    %617 = vmatprep.subr.mxu0 0.0
    %618 = vmatpush1.msra.mxu0 0.0
    %619 = vmatprep.subr.mxu0 0.0
    %620 = vmatpush1.msra.mxu0 0.0
    %621 = vmatprep.subr.mxu0 0.0
    %622 = vmatpush1.msra.mxu0 0.0
    %623 = vmatprep.subr.mxu0 0.0
    %624 = vmatpush1.msra.mxu0 0.0
    %625 = vmatprep.subr.mxu0 0.0
    %626 = vmatpush1.msra.mxu0 0.0
    %627 = vmatprep.subr.mxu0 0.0
    %628 = vmatpush1.msra.mxu0 0.0
    %629 = vmatprep.subr.mxu0 0.0
    %630 = vmatpush1.msra.mxu0 0.0
    %631 = vmatprep.subr.mxu0 0.0
    %632 = vmatpush1.msra.mxu0 0.0
    %633 = vmatprep.subr.mxu0 0.0
    %634 = vmatpush1.msra.mxu0 0.0
    %635 = vmatprep.subr.mxu0 0.0
    %636 = vmatpush1.msra.mxu0 0.0
    %637 = vmatprep.subr.mxu0 0.0
    %638 = vmatpush1.msra.mxu0 0.0
    %639 = vmatprep.subr.mxu0 0.0
    %640 = vmatpush1.msra.mxu0 0.0
    %641 = vmatprep.subr.mxu0 0.0
    %642 = vmatpush1.msra.mxu0 0.0
    %643 = vmatprep.subr.mxu0 0.0
    %644 = vmatpush1.msra.mxu0 0.0
    %645 = vmatprep.subr.mxu0 0.0
    %646 = vmatpush1.msra.mxu0 0.0
    %647 = vmatprep.subr.mxu0 0.0
    %648 = vmatpush1.msra.mxu0 0.0
    %649 = vmatprep.subr.mxu0 0.0
    %650 = vmatpush1.msra.mxu0 0.0
    %651 = vmatprep.subr.mxu0 0.0
    %652 = vmatpush1.msra.mxu0 0.0
    %653 = vmatprep.subr.mxu0 0.0
    %654 = vmatpush1.msra.mxu0 0.0
    %655 = vmatprep.subr.mxu0 0.0
    %656 = vmatpush1.msra.mxu0 0.0
    %657 = vmatprep.subr.mxu0 0.0
    %658 = vmatpush1.msra.mxu0 0.0
    %659 = vmatprep.subr.mxu0 0.0
    %660 = vmatpush1.msra.mxu0 0.0
    %661 = vmatprep.mubr.f32.mxu0 0.0
    %662 = vmatmul.mubr.f32.gmra.mrb[0].mxu0 %v595
    %v663 = vpop.f32.mrb[0].mxu0
    %v664 = vadd.f32 0.0, %v663
    %v665 = vpop.f32.mrb[0].mxu0
    %v666 = vadd.f32 0.0, %v665
    %667 = vdwg.mxu0
    %v668 = vadd.f32 %v590, %v664
    %v669 = vadd.f32 %v591, %v666
    %v670 = vtanh.pop %v668
    %v671 = vtanh.pop %v669
    %v672 = vxor.u32 %v668, 2147483648
    %v673 = vxor.u32 %v669, 2147483648
    %v674 = vmul.f32 %v672, 1.442695
    %v675 = vpow.pop %v674
    %v676 = vmul.f32 %v673, 1.442695
    %v677 = vpow.pop %v676
    %v678 = vadd.f32 %v675, 1.0
    %v679 = vadd.f32 %v677, 1.0
    %v680 = vrcp.pop %v678
    %v681 = vmul.f32 1.0, %v680
    %v682 = vrcp.pop %v679
    %v683 = vmul.f32 1.0, %v682
    %v684 = vsel %vm167, %v670, %v681
    %v685 = vsel %vm168, %v671, %v683
    %v686 = vmul.f32 %v684, %v571
    %v687 = vmul.f32 %v684, %v685
    %689 = vrot.lane.b32.xlu0 %v687, 64
    %v690 = vpop.permute.xlu0 %689
    %v692 = vadd.f32 %v686, %v690
    %v693 = vtanh.pop %v692
    %v694 = vmul.f32 %v685, %v693
    %v695 = vsel %vm193, %v584, %v576
    %v696 = vsel %vm194, %v587, %v579
    %698 = vrot.lane.b32.xlu0 %v694, 64
    %v699 = vpop.permute.xlu0 %698
    %v700 = vsel %vm232, %v699, 0
    %702 = vmatprep.subr.mxu0 %v196
    %703 = vmatpush1.msra.mxu0 %v195
    %704 = vmatprep.subr.mxu0 %v198
    %705 = vmatpush1.msra.mxu0 %v197
    %706 = vmatprep.subr.mxu0 %v200
    %707 = vmatpush1.msra.mxu0 %v199
    %708 = vmatprep.subr.mxu0 %v202
    %709 = vmatpush1.msra.mxu0 %v201
    %710 = vmatprep.subr.mxu0 %v204
    %711 = vmatpush1.msra.mxu0 %v203
    %712 = vmatprep.subr.mxu0 %v206
    %713 = vmatpush1.msra.mxu0 %v205
    %714 = vmatprep.subr.mxu0 %v208
    %715 = vmatpush1.msra.mxu0 %v207
    %716 = vmatprep.subr.mxu0 %v210
    %717 = vmatpush1.msra.mxu0 %v209
    %718 = vmatprep.subr.mxu0 0.0
    %719 = vmatpush1.msra.mxu0 0.0
    %720 = vmatprep.subr.mxu0 0.0
    %721 = vmatpush1.msra.mxu0 0.0
    %722 = vmatprep.subr.mxu0 0.0
    %723 = vmatpush1.msra.mxu0 0.0
    %724 = vmatprep.subr.mxu0 0.0
    %725 = vmatpush1.msra.mxu0 0.0
    %726 = vmatprep.subr.mxu0 0.0
    %727 = vmatpush1.msra.mxu0 0.0
    %728 = vmatprep.subr.mxu0 0.0
    %729 = vmatpush1.msra.mxu0 0.0
    %730 = vmatprep.subr.mxu0 0.0
    %731 = vmatpush1.msra.mxu0 0.0
    %732 = vmatprep.subr.mxu0 0.0
    %733 = vmatpush1.msra.mxu0 0.0
    %734 = vmatprep.subr.mxu0 0.0
    %735 = vmatpush1.msra.mxu0 0.0
    %736 = vmatprep.subr.mxu0 0.0
    %737 = vmatpush1.msra.mxu0 0.0
    %738 = vmatprep.subr.mxu0 0.0
    %739 = vmatpush1.msra.mxu0 0.0
    %740 = vmatprep.subr.mxu0 0.0
    %741 = vmatpush1.msra.mxu0 0.0
    %742 = vmatprep.subr.mxu0 0.0
    %743 = vmatpush1.msra.mxu0 0.0
    %744 = vmatprep.subr.mxu0 0.0
    %745 = vmatpush1.msra.mxu0 0.0
    %746 = vmatprep.subr.mxu0 0.0
    %747 = vmatpush1.msra.mxu0 0.0
    %748 = vmatprep.subr.mxu0 0.0
    %749 = vmatpush1.msra.mxu0 0.0
    %750 = vmatprep.subr.mxu0 0.0
    %751 = vmatpush1.msra.mxu0 0.0
    %752 = vmatprep.subr.mxu0 0.0
    %753 = vmatpush1.msra.mxu0 0.0
    %754 = vmatprep.subr.mxu0 0.0
    %755 = vmatpush1.msra.mxu0 0.0
    %756 = vmatprep.subr.mxu0 0.0
    %757 = vmatpush1.msra.mxu0 0.0
    %758 = vmatprep.subr.mxu0 0.0
    %759 = vmatpush1.msra.mxu0 0.0
    %760 = vmatprep.subr.mxu0 0.0
    %761 = vmatpush1.msra.mxu0 0.0
    %762 = vmatprep.subr.mxu0 0.0
    %763 = vmatpush1.msra.mxu0 0.0
    %764 = vmatprep.subr.mxu0 0.0
    %765 = vmatpush1.msra.mxu0 0.0
    %766 = vmatprep.mubr.f32.mxu0 0.0
    %767 = vmatmul.mubr.f32.gmra.mrb[0].mxu0 %v700
    %v768 = vpop.f32.mrb[0].mxu0
    %v769 = vadd.f32 0.0, %v768
    %v770 = vpop.f32.mrb[0].mxu0
    %v771 = vadd.f32 0.0, %v770
    %772 = vdwg.mxu0
    %v773 = vadd.f32 %v695, %v769
    %v774 = vadd.f32 %v696, %v771
    %v775 = vtanh.pop %v773
    %v776 = vtanh.pop %v774
    %v777 = vxor.u32 %v773, 2147483648
    %v778 = vxor.u32 %v774, 2147483648
    %v779 = vmul.f32 %v777, 1.442695
    %v780 = vpow.pop %v779
    %v781 = vmul.f32 %v778, 1.442695
    %v782 = vpow.pop %v781
    %v783 = vadd.f32 %v780, 1.0
    %v784 = vadd.f32 %v782, 1.0
    %v785 = vrcp.pop %v783
    %v786 = vmul.f32 1.0, %v785
    %v787 = vrcp.pop %v784
    %v788 = vmul.f32 1.0, %v787
    %v789 = vsel %vm167, %v775, %v786
    %v790 = vsel %vm168, %v776, %v788
    %v791 = vmul.f32 %v789, %v692
    %v792 = vmul.f32 %v789, %v790
    %794 = vrot.lane.b32.xlu0 %v792, 64
    %v795 = vpop.permute.xlu0 %794
    %v797 = vadd.f32 %v791, %v795
    %v798 = vtanh.pop %v797
    %v799 = vmul.f32 %v790, %v798
    %v800 = vsel %vm193, %v463, %v455
    %v801 = vsel %vm194, %v466, %v458
    %803 = vrot.lane.b32.xlu0 %v799, 64
    %v804 = vpop.permute.xlu0 %803
    %v805 = vsel %vm232, %v804, 0
    %807 = vmatprep.subr.mxu0 %v196
    %808 = vmatpush1.msra.mxu0 %v195
    %809 = vmatprep.subr.mxu0 %v198
    %810 = vmatpush1.msra.mxu0 %v197
    %811 = vmatprep.subr.mxu0 %v200
    %812 = vmatpush1.msra.mxu0 %v199
    %813 = vmatprep.subr.mxu0 %v202
    %814 = vmatpush1.msra.mxu0 %v201
    %815 = vmatprep.subr.mxu0 %v204
    %816 = vmatpush1.msra.mxu0 %v203
    %817 = vmatprep.subr.mxu0 %v206
    %818 = vmatpush1.msra.mxu0 %v205
    %819 = vmatprep.subr.mxu0 %v208
    %820 = vmatpush1.msra.mxu0 %v207
    %821 = vmatprep.subr.mxu0 %v210
    %822 = vmatpush1.msra.mxu0 %v209
    %823 = vmatprep.subr.mxu0 0.0
    %824 = vmatpush1.msra.mxu0 0.0
    %825 = vmatprep.subr.mxu0 0.0
    %826 = vmatpush1.msra.mxu0 0.0
    %827 = vmatprep.subr.mxu0 0.0
    %828 = vmatpush1.msra.mxu0 0.0
    %829 = vmatprep.subr.mxu0 0.0
    %830 = vmatpush1.msra.mxu0 0.0
    %831 = vmatprep.subr.mxu0 0.0
    %832 = vmatpush1.msra.mxu0 0.0
    %833 = vmatprep.subr.mxu0 0.0
    %834 = vmatpush1.msra.mxu0 0.0
    %835 = vmatprep.subr.mxu0 0.0
    %836 = vmatpush1.msra.mxu0 0.0
    %837 = vmatprep.subr.mxu0 0.0
    %838 = vmatpush1.msra.mxu0 0.0
    %839 = vmatprep.subr.mxu0 0.0
    %840 = vmatpush1.msra.mxu0 0.0
    %841 = vmatprep.subr.mxu0 0.0
    %842 = vmatpush1.msra.mxu0 0.0
    %843 = vmatprep.subr.mxu0 0.0
    %844 = vmatpush1.msra.mxu0 0.0
    %845 = vmatprep.subr.mxu0 0.0
    %846 = vmatpush1.msra.mxu0 0.0
    %847 = vmatprep.subr.mxu0 0.0
    %848 = vmatpush1.msra.mxu0 0.0
    %849 = vmatprep.subr.mxu0 0.0
    %850 = vmatpush1.msra.mxu0 0.0
    %851 = vmatprep.subr.mxu0 0.0
    %852 = vmatpush1.msra.mxu0 0.0
    %853 = vmatprep.subr.mxu0 0.0
    %854 = vmatpush1.msra.mxu0 0.0
    %855 = vmatprep.subr.mxu0 0.0
    %856 = vmatpush1.msra.mxu0 0.0
    %857 = vmatprep.subr.mxu0 0.0
    %858 = vmatpush1.msra.mxu0 0.0
    %859 = vmatprep.subr.mxu0 0.0
    %860 = vmatpush1.msra.mxu0 0.0
    %861 = vmatprep.subr.mxu0 0.0
    %862 = vmatpush1.msra.mxu0 0.0
    %863 = vmatprep.subr.mxu0 0.0
    %864 = vmatpush1.msra.mxu0 0.0
    %865 = vmatprep.subr.mxu0 0.0
    %866 = vmatpush1.msra.mxu0 0.0
    %867 = vmatprep.subr.mxu0 0.0
    %868 = vmatpush1.msra.mxu0 0.0
    %869 = vmatprep.subr.mxu0 0.0
    %870 = vmatpush1.msra.mxu0 0.0
    %871 = vmatprep.mubr.f32.mxu0 0.0
    %872 = vmatmul.mubr.f32.gmra.mrb[0].mxu0 %v805
    %v873 = vpop.f32.mrb[0].mxu0
    %v874 = vadd.f32 0.0, %v873
    %v875 = vpop.f32.mrb[0].mxu0
    %v876 = vadd.f32 0.0, %v875
    %877 = vdwg.mxu0
    %v878 = vadd.f32 %v800, %v874
    %v879 = vadd.f32 %v801, %v876
    %v880 = vtanh.pop %v878
    %v881 = vtanh.pop %v879
    %v882 = vxor.u32 %v878, 2147483648
    %v883 = vxor.u32 %v879, 2147483648
    %v884 = vmul.f32 %v882, 1.442695
    %v885 = vpow.pop %v884
    %v886 = vmul.f32 %v883, 1.442695
    %v887 = vpow.pop %v886
    %v888 = vadd.f32 %v885, 1.0
    %v889 = vadd.f32 %v887, 1.0
    %v890 = vrcp.pop %v888
    %v891 = vmul.f32 1.0, %v890
    %v892 = vrcp.pop %v889
    %v893 = vmul.f32 1.0, %v892
    %v894 = vsel %vm167, %v880, %v891
    %v895 = vsel %vm168, %v881, %v893
    %v896 = vmul.f32 %v894, %v797
    %v897 = vmul.f32 %v894, %v895
    %899 = vrot.lane.b32.xlu0 %v897, 64
    %v900 = vpop.permute.xlu0 %899
    %v902 = vadd.f32 %v896, %v900
    %v903 = vtanh.pop %v902
    %v904 = vmul.f32 %v895, %v903
    %v905 = vsel %vm193, %v343, %v336
    %v906 = vsel %vm194, %v345, %v339
    %908 = vrot.lane.b32.xlu0 %v904, 64
    %v909 = vpop.permute.xlu0 %908
    %v910 = vsel %vm232, %v909, 0
    %912 = vmatprep.subr.mxu0 %v196
    %913 = vmatpush1.msra.mxu0 %v195
    %914 = vmatprep.subr.mxu0 %v198
    %915 = vmatpush1.msra.mxu0 %v197
    %916 = vmatprep.subr.mxu0 %v200
    %917 = vmatpush1.msra.mxu0 %v199
    %918 = vmatprep.subr.mxu0 %v202
    %919 = vmatpush1.msra.mxu0 %v201
    %920 = vmatprep.subr.mxu0 %v204
    %921 = vmatpush1.msra.mxu0 %v203
    %922 = vmatprep.subr.mxu0 %v206
    %923 = vmatpush1.msra.mxu0 %v205
    %924 = vmatprep.subr.mxu0 %v208
    %925 = vmatpush1.msra.mxu0 %v207
    %926 = vmatprep.subr.mxu0 %v210
    %927 = vmatpush1.msra.mxu0 %v209
    %928 = vmatprep.subr.mxu0 0.0
    %929 = vmatpush1.msra.mxu0 0.0
    %930 = vmatprep.subr.mxu0 0.0
    %931 = vmatpush1.msra.mxu0 0.0
    %932 = vmatprep.subr.mxu0 0.0
    %933 = vmatpush1.msra.mxu0 0.0
    %934 = vmatprep.subr.mxu0 0.0
    %935 = vmatpush1.msra.mxu0 0.0
    %936 = vmatprep.subr.mxu0 0.0
    %937 = vmatpush1.msra.mxu0 0.0
    %938 = vmatprep.subr.mxu0 0.0
    %939 = vmatpush1.msra.mxu0 0.0
    %940 = vmatprep.subr.mxu0 0.0
    %941 = vmatpush1.msra.mxu0 0.0
    %942 = vmatprep.subr.mxu0 0.0
    %943 = vmatpush1.msra.mxu0 0.0
    %944 = vmatprep.subr.mxu0 0.0
    %945 = vmatpush1.msra.mxu0 0.0
    %946 = vmatprep.subr.mxu0 0.0
    %947 = vmatpush1.msra.mxu0 0.0
    %948 = vmatprep.subr.mxu0 0.0
    %949 = vmatpush1.msra.mxu0 0.0
    %950 = vmatprep.subr.mxu0 0.0
    %951 = vmatpush1.msra.mxu0 0.0
    %952 = vmatprep.subr.mxu0 0.0
    %953 = vmatpush1.msra.mxu0 0.0
    %954 = vmatprep.subr.mxu0 0.0
    %955 = vmatpush1.msra.mxu0 0.0
    %956 = vmatprep.subr.mxu0 0.0
    %957 = vmatpush1.msra.mxu0 0.0
    %958 = vmatprep.subr.mxu0 0.0
    %959 = vmatpush1.msra.mxu0 0.0
    %960 = vmatprep.subr.mxu0 0.0
    %961 = vmatpush1.msra.mxu0 0.0
    %962 = vmatprep.subr.mxu0 0.0
    %963 = vmatpush1.msra.mxu0 0.0
    %964 = vmatprep.subr.mxu0 0.0
    %965 = vmatpush1.msra.mxu0 0.0
    %966 = vmatprep.subr.mxu0 0.0
    %967 = vmatpush1.msra.mxu0 0.0
    %968 = vmatprep.subr.mxu0 0.0
    %969 = vmatpush1.msra.mxu0 0.0
    %970 = vmatprep.subr.mxu0 0.0
    %971 = vmatpush1.msra.mxu0 0.0
    %972 = vmatprep.subr.mxu0 0.0
    %973 = vmatpush1.msra.mxu0 0.0
    %974 = vmatprep.subr.mxu0 0.0
    %975 = vmatpush1.msra.mxu0 0.0
    %976 = vmatprep.mubr.f32.mxu0 0.0
    %977 = vmatmul.mubr.f32.gmra.mrb[0].mxu0 %v910
    %v978 = vpop.f32.mrb[0].mxu0
    %v979 = vadd.f32 0.0, %v978
    %v980 = vpop.f32.mrb[0].mxu0
    %v981 = vadd.f32 0.0, %v980
    %982 = vdwg.mxu0
    %v983 = vadd.f32 %v905, %v979
    %v984 = vadd.f32 %v906, %v981
    %v985 = vtanh.pop %v983
    %v986 = vtanh.pop %v984
    %v987 = vxor.u32 %v983, 2147483648
    %v988 = vxor.u32 %v984, 2147483648
    %v989 = vmul.f32 %v987, 1.442695
    %v990 = vpow.pop %v989
    %v991 = vmul.f32 %v988, 1.442695
    %v992 = vpow.pop %v991
    %v993 = vadd.f32 %v990, 1.0
    %v994 = vadd.f32 %v992, 1.0
    %v995 = vrcp.pop %v993
    %v996 = vmul.f32 1.0, %v995
    %v997 = vrcp.pop %v994
    %v998 = vmul.f32 1.0, %v997
    %v999 = vsel %vm167, %v985, %v996
    %v1000 = vsel %vm168, %v986, %v998
    %v1001 = vmul.f32 %v999, %v902
    %v1002 = vmul.f32 %v999, %v1000
    %1004 = vrot.lane.b32.xlu0 %v1002, 64
    %v1005 = vpop.permute.xlu0 %1004
    %v1007 = vadd.f32 %v1001, %v1005
    %v1008 = vtanh.pop %v1007
    %v1009 = vmul.f32 %v1000, %v1008
    %v1010 = vsel %vm193, %v225, %v218
    %v1011 = vsel %vm194, %v227, %v221
    %1013 = vrot.lane.b32.xlu0 %v1009, 64
    %v1014 = vpop.permute.xlu0 %1013
    %v1015 = vsel %vm232, %v1014, 0
    %1017 = vmatprep.subr.mxu0 %v196
    %1018 = vmatpush1.msra.mxu0 %v195
    %1019 = vmatprep.subr.mxu0 %v198
    %1020 = vmatpush1.msra.mxu0 %v197
    %1021 = vmatprep.subr.mxu0 %v200
    %1022 = vmatpush1.msra.mxu0 %v199
    %1023 = vmatprep.subr.mxu0 %v202
    %1024 = vmatpush1.msra.mxu0 %v201
    %1025 = vmatprep.subr.mxu0 %v204
    %1026 = vmatpush1.msra.mxu0 %v203
    %1027 = vmatprep.subr.mxu0 %v206
    %1028 = vmatpush1.msra.mxu0 %v205
    %1029 = vmatprep.subr.mxu0 %v208
    %1030 = vmatpush1.msra.mxu0 %v207
    %1031 = vmatprep.subr.mxu0 %v210
    %1032 = vmatpush1.msra.mxu0 %v209
    %1033 = vmatprep.subr.mxu0 0.0
    %1034 = vmatpush1.msra.mxu0 0.0
    %1035 = vmatprep.subr.mxu0 0.0
    %1036 = vmatpush1.msra.mxu0 0.0
    %1037 = vmatprep.subr.mxu0 0.0
    %1038 = vmatpush1.msra.mxu0 0.0
    %1039 = vmatprep.subr.mxu0 0.0
    %1040 = vmatpush1.msra.mxu0 0.0
    %1041 = vmatprep.subr.mxu0 0.0
    %1042 = vmatpush1.msra.mxu0 0.0
    %1043 = vmatprep.subr.mxu0 0.0
    %1044 = vmatpush1.msra.mxu0 0.0
    %1045 = vmatprep.subr.mxu0 0.0
    %1046 = vmatpush1.msra.mxu0 0.0
    %1047 = vmatprep.subr.mxu0 0.0
    %1048 = vmatpush1.msra.mxu0 0.0
    %1049 = vmatprep.subr.mxu0 0.0
    %1050 = vmatpush1.msra.mxu0 0.0
    %1051 = vmatprep.subr.mxu0 0.0
    %1052 = vmatpush1.msra.mxu0 0.0
    %1053 = vmatprep.subr.mxu0 0.0
    %1054 = vmatpush1.msra.mxu0 0.0
    %1055 = vmatprep.subr.mxu0 0.0
    %1056 = vmatpush1.msra.mxu0 0.0
    %1057 = vmatprep.subr.mxu0 0.0
    %1058 = vmatpush1.msra.mxu0 0.0
    %1059 = vmatprep.subr.mxu0 0.0
    %1060 = vmatpush1.msra.mxu0 0.0
    %1061 = vmatprep.subr.mxu0 0.0
    %1062 = vmatpush1.msra.mxu0 0.0
    %1063 = vmatprep.subr.mxu0 0.0
    %1064 = vmatpush1.msra.mxu0 0.0
    %1065 = vmatprep.subr.mxu0 0.0
    %1066 = vmatpush1.msra.mxu0 0.0
    %1067 = vmatprep.subr.mxu0 0.0
    %1068 = vmatpush1.msra.mxu0 0.0
    %1069 = vmatprep.subr.mxu0 0.0
    %1070 = vmatpush1.msra.mxu0 0.0
    %1071 = vmatprep.subr.mxu0 0.0
    %1072 = vmatpush1.msra.mxu0 0.0
    %1073 = vmatprep.subr.mxu0 0.0
    %1074 = vmatpush1.msra.mxu0 0.0
    %1075 = vmatprep.subr.mxu0 0.0
    %1076 = vmatpush1.msra.mxu0 0.0
    %1077 = vmatprep.subr.mxu0 0.0
    %1078 = vmatpush1.msra.mxu0 0.0
    %1079 = vmatprep.subr.mxu0 0.0
    %1080 = vmatpush1.msra.mxu0 0.0
    %1081 = vmatprep.mubr.f32.mxu0 0.0
    %1082 = vmatmul.mubr.f32.gmra.mrb[0].mxu0 %v1015
    %v1083 = vpop.f32.mrb[0].mxu0
    %v1084 = vadd.f32 0.0, %v1083
    %v1085 = vpop.f32.mrb[0].mxu0
    %v1086 = vadd.f32 0.0, %v1085
    %1087 = vdwg.mxu0
    %v1088 = vadd.f32 %v1010, %v1084
    %v1089 = vadd.f32 %v1011, %v1086
    %v1090 = vtanh.pop %v1088
    %v1091 = vtanh.pop %v1089
    %v1092 = vxor.u32 %v1088, 2147483648
    %v1093 = vxor.u32 %v1089, 2147483648
    %v1094 = vmul.f32 %v1092, 1.442695
    %v1095 = vpow.pop %v1094
    %v1096 = vmul.f32 %v1093, 1.442695
    %v1097 = vpow.pop %v1096
    %v1098 = vadd.f32 %v1095, 1.0
    %v1099 = vadd.f32 %v1097, 1.0
    %v1100 = vrcp.pop %v1098
    %v1101 = vmul.f32 1.0, %v1100
    %v1102 = vrcp.pop %v1099
    %v1103 = vmul.f32 1.0, %v1102
    %v1104 = vsel %vm167, %v1090, %v1101
    %v1105 = vsel %vm168, %v1091, %v1103
    %v1106 = vmul.f32 %v1104, %v1007
    %v1107 = vmul.f32 %v1104, %v1105
    %1109 = vrot.lane.b32.xlu0 %v1107, 64
    %v1110 = vpop.permute.xlu0 %1109
    %v1112 = vadd.f32 %v1106, %v1110
    %v1113 = vtanh.pop %v1112
    %v1114 = vmul.f32 %v1105, %v1113
    %v1116 = vunpack.c.l.s4 1966171168
    %v1117 = vunpack.c.0.s8 %v1116
    %v1118 = vlaneseq
    %v1119 = vshrl.u32 %v1118, 7
    %v1120 = vsub.s32 %v1117, %v1119
    %v1121 = vrot.slane %v333, %v1120
    %v1122 = vcombine.high %v1121, %v1121
    %v1124 = vunpack.c.l.s4 1966171168
    %v1125 = vunpack.c.0.s8 %v1124
    %v1126 = vlaneseq
    %v1127 = vshrl.u32 %v1126, 7
    %v1128 = vsub.s32 %v1125, %v1127
    %v1129 = vrot.slane %v1121, %v1128
    %v1131 = vunpack.c.l.s4 1966171168
    %v1132 = vunpack.c.0.s8 %v1131
    %v1133 = vlaneseq
    %v1134 = vshrl.u32 %v1133, 7
    %v1135 = vsub.s32 %v1132, %v1134
    %v1136 = vrot.slane %v1122, %v1135
    %v1140 = vunpack.c.l.s4 1966171168
    %v1141 = vunpack.c.0.s8 %v1140
    %v1142 = vlaneseq
    %v1143 = vshrl.u32 %v1142, 7
    %v1144 = vsub.s32 %v1141, %v1143
    %v1145 = vrot.slane %v452, %v1144
    %v1146 = vcombine.high %v1145, %v1145
    %v1148 = vunpack.c.l.s4 1966171168
    %v1149 = vunpack.c.0.s8 %v1148
    %v1150 = vlaneseq
    %v1151 = vshrl.u32 %v1150, 7
    %v1152 = vsub.s32 %v1149, %v1151
    %v1153 = vrot.slane %v1145, %v1152
    %v1155 = vunpack.c.l.s4 1966171168
    %v1156 = vunpack.c.0.s8 %v1155
    %v1157 = vlaneseq
    %v1158 = vshrl.u32 %v1157, 7
    %v1159 = vsub.s32 %v1156, %v1158
    %v1160 = vrot.slane %v1146, %v1159
    %v1162 = vunpack.c.l.s4 1966171168
    %v1163 = vunpack.c.0.s8 %v1162
    %v1164 = vlaneseq
    %v1165 = vshrl.u32 %v1164, 7
    %v1166 = vsub.s32 %v1163, %v1165
    %v1167 = vrot.slane %v573, %v1166
    %v1168 = vcombine.high %v1167, %v1167
    %v1170 = vunpack.c.l.s4 1966171168
    %v1171 = vunpack.c.0.s8 %v1170
    %v1172 = vlaneseq
    %v1173 = vshrl.u32 %v1172, 7
    %v1174 = vsub.s32 %v1171, %v1173
    %v1175 = vrot.slane %v1167, %v1174
    %v1177 = vunpack.c.l.s4 1966171168
    %v1178 = vunpack.c.0.s8 %v1177
    %v1179 = vlaneseq
    %v1180 = vshrl.u32 %v1179, 7
    %v1181 = vsub.s32 %v1178, %v1180
    %v1182 = vrot.slane %v1168, %v1181
    %v1184 = vunpack.c.l.s4 1966171168
    %v1185 = vunpack.c.0.s8 %v1184
    %v1186 = vlaneseq
    %v1187 = vshrl.u32 %v1186, 7
    %v1188 = vsub.s32 %v1185, %v1187
    %v1189 = vrot.slane %v694, %v1188
    %v1190 = vcombine.high %v1189, %v1189
    %v1192 = vunpack.c.l.s4 1966171168
    %v1193 = vunpack.c.0.s8 %v1192
    %v1194 = vlaneseq
    %v1195 = vshrl.u32 %v1194, 7
    %v1196 = vsub.s32 %v1193, %v1195
    %v1197 = vrot.slane %v1189, %v1196
    %v1199 = vunpack.c.l.s4 1966171168
    %v1200 = vunpack.c.0.s8 %v1199
    %v1201 = vlaneseq
    %v1202 = vshrl.u32 %v1201, 7
    %v1203 = vsub.s32 %v1200, %v1202
    %v1204 = vrot.slane %v1190, %v1203
    %v1206 = vunpack.c.l.s4 1966171168
    %v1207 = vunpack.c.0.s8 %v1206
    %v1208 = vlaneseq
    %v1209 = vshrl.u32 %v1208, 7
    %v1210 = vsub.s32 %v1207, %v1209
    %v1211 = vrot.slane %v799, %v1210
    %v1212 = vcombine.high %v1211, %v1211
    %v1214 = vunpack.c.l.s4 1966171168
    %v1215 = vunpack.c.0.s8 %v1214
    %v1216 = vlaneseq
    %v1217 = vshrl.u32 %v1216, 7
    %v1218 = vsub.s32 %v1215, %v1217
    %v1219 = vrot.slane %v1211, %v1218
    %v1221 = vunpack.c.l.s4 1966171168
    %v1222 = vunpack.c.0.s8 %v1221
    %v1223 = vlaneseq
    %v1224 = vshrl.u32 %v1223, 7
    %v1225 = vsub.s32 %v1222, %v1224
    %v1226 = vrot.slane %v1212, %v1225
    %v1228 = vunpack.c.l.s4 1966171168
    %v1229 = vunpack.c.0.s8 %v1228
    %v1230 = vlaneseq
    %v1231 = vshrl.u32 %v1230, 7
    %v1232 = vsub.s32 %v1229, %v1231
    %v1233 = vrot.slane %v904, %v1232
    %v1234 = vcombine.high %v1233, %v1233
    %v1236 = vunpack.c.l.s4 1966171168
    %v1237 = vunpack.c.0.s8 %v1236
    %v1238 = vlaneseq
    %v1239 = vshrl.u32 %v1238, 7
    %v1240 = vsub.s32 %v1237, %v1239
    %v1241 = vrot.slane %v1233, %v1240
    %v1243 = vunpack.c.l.s4 1966171168
    %v1244 = vunpack.c.0.s8 %v1243
    %v1245 = vlaneseq
    %v1246 = vshrl.u32 %v1245, 7
    %v1247 = vsub.s32 %v1244, %v1246
    %v1248 = vrot.slane %v1234, %v1247
    %v1250 = vunpack.c.l.s4 1966171168
    %v1251 = vunpack.c.0.s8 %v1250
    %v1252 = vlaneseq
    %v1253 = vshrl.u32 %v1252, 7
    %v1254 = vsub.s32 %v1251, %v1253
    %v1255 = vrot.slane %v1009, %v1254
    %v1256 = vcombine.high %v1255, %v1255
    %v1258 = vunpack.c.l.s4 1966171168
    %v1259 = vunpack.c.0.s8 %v1258
    %v1260 = vlaneseq
    %v1261 = vshrl.u32 %v1260, 7
    %v1262 = vsub.s32 %v1259, %v1261
    %v1263 = vrot.slane %v1255, %v1262
    %v1265 = vunpack.c.l.s4 1966171168
    %v1266 = vunpack.c.0.s8 %v1265
    %v1267 = vlaneseq
    %v1268 = vshrl.u32 %v1267, 7
    %v1269 = vsub.s32 %v1266, %v1268
    %v1270 = vrot.slane %v1256, %v1269
    %v1273 = vunpack.c.l.s4 1966171168
    %v1274 = vunpack.c.0.s8 %v1273
    %v1275 = vlaneseq
    %v1276 = vshrl.u32 %v1275, 7
    %v1277 = vsub.s32 %v1274, %v1276
    %v1278 = vrot.slane %v1114, %v1277
    %v1279 = vcombine.high %v1278, %v1278
    %v1281 = vunpack.c.l.s4 1966171168
    %v1282 = vunpack.c.0.s8 %v1281
    %v1283 = vlaneseq
    %v1284 = vshrl.u32 %v1283, 7
    %v1285 = vsub.s32 %v1282, %v1284
    %v1286 = vrot.slane %v1278, %v1285
    %v1288 = vunpack.c.l.s4 1966171168
    %v1289 = vunpack.c.0.s8 %v1288
    %v1290 = vlaneseq
    %v1291 = vshrl.u32 %v1290, 7
    %v1292 = vsub.s32 %v1289, %v1291
    %v1293 = vrot.slane %v1279, %v1292
    %v1296 = vlaneseq
    %v1297 = vshrl.u32 %v1296, 7
    %v1298 = vsub.s32 0, %v1297
    %v1299 = vrot.slane %v1153, %v1298
    %v1300 = vlaneseq
    %v1301 = vshrl.u32 %v1300, 7
    %v1302 = vsub.s32 0, %v1301
    %v1303 = vrot.slane %v1160, %v1302
    %v1306 = vlaneseq
    %v1307 = vshrl.u32 %v1306, 7
    %v1308 = vsub.s32 0, %v1307
    %v1309 = vrot.slane %v1175, %v1308
    %v1310 = vlaneseq
    %v1311 = vshrl.u32 %v1310, 7
    %v1312 = vsub.s32 0, %v1311
    %v1313 = vrot.slane %v1182, %v1312
    %v1316 = vlaneseq
    %v1317 = vshrl.u32 %v1316, 7
    %v1318 = vsub.s32 0, %v1317
    %v1319 = vrot.slane %v1197, %v1318
    %v1320 = vlaneseq
    %v1321 = vshrl.u32 %v1320, 7
    %v1322 = vsub.s32 0, %v1321
    %v1323 = vrot.slane %v1204, %v1322
    %v1326 = vlaneseq
    %v1327 = vshrl.u32 %v1326, 7
    %v1328 = vsub.s32 0, %v1327
    %v1329 = vrot.slane %v1219, %v1328
    %v1330 = vlaneseq
    %v1331 = vshrl.u32 %v1330, 7
    %v1332 = vsub.s32 0, %v1331
    %v1333 = vrot.slane %v1226, %v1332
    %v1336 = vlaneseq
    %v1337 = vshrl.u32 %v1336, 7
    %v1338 = vsub.s32 0, %v1337
    %v1339 = vrot.slane %v1241, %v1338
    %v1340 = vlaneseq
    %v1341 = vshrl.u32 %v1340, 7
    %v1342 = vsub.s32 0, %v1341
    %v1343 = vrot.slane %v1248, %v1342
    %v1346 = vlaneseq
    %v1347 = vshrl.u32 %v1346, 7
    %v1348 = vsub.s32 0, %v1347
    %v1349 = vrot.slane %v1263, %v1348
    %v1350 = vlaneseq
    %v1351 = vshrl.u32 %v1350, 7
    %v1352 = vsub.s32 0, %v1351
    %v1353 = vrot.slane %v1270, %v1352
    %v1356 = vlaneseq
    %v1357 = vshrl.u32 %v1356, 7
    %v1358 = vsub.s32 0, %v1357
    %v1359 = vrot.slane %v1286, %v1358
    %v1360 = vlaneseq
    %v1361 = vshrl.u32 %v1360, 7
    %v1362 = vsub.s32 0, %v1361
    %v1363 = vrot.slane %v1293, %v1362
    %vm1366 = vcmask 1040384
    %v1367 = vsel %vm1366, %v1129, %v1299
    %v1368 = vsel %vm1366, %v1136, %v1303
    %vm1369 = vcmask 1041408
    %v1370 = vsel %vm1369, %v1367, %v1309
    %v1371 = vsel %vm1369, %v1368, %v1313
    %vm1372 = vcmask 1042432
    %v1373 = vsel %vm1372, %v1370, %v1319
    %v1374 = vsel %vm1372, %v1371, %v1323
    %vm1375 = vcmask 1043456
    %v1376 = vsel %vm1375, %v1373, %v1329
    %v1377 = vsel %vm1375, %v1374, %v1333
    %vm1378 = vcmask 1044480
    %v1379 = vsel %vm1378, %v1376, %v1339
    %v1380 = vsel %vm1378, %v1377, %v1343
    %vm1381 = vcmask 1045504
    %v1382 = vsel %vm1381, %v1379, %v1349
    %v1383 = vsel %vm1381, %v1380, %v1353
    %vm1384 = vcmask 1046528
    %v1385 = vsel %vm1384, %v1382, %v1359
    %v1386 = vsel %vm1384, %v1383, %v1363
    %v1387 = vlaneseq
    %v1388 = vshrl.u32 %v1387, 7
    %v1389 = vsub.s32 0, %v1388
    %v1390 = vrot.slane %v1129, %v1389
    %v1391 = vlaneseq
    %v1392 = vshrl.u32 %v1391, 7
    %v1393 = vsub.s32 0, %v1392
    %v1394 = vrot.slane %v1136, %v1393
    %v1397 = vsel %vm1366, %v1286, %v1349
    %v1398 = vsel %vm1366, %v1293, %v1353
    %v1399 = vsel %vm1369, %v1397, %v1339
    %v1400 = vsel %vm1369, %v1398, %v1343
    %v1401 = vsel %vm1372, %v1399, %v1329
    %v1402 = vsel %vm1372, %v1400, %v1333
    %v1403 = vsel %vm1375, %v1401, %v1319
    %v1404 = vsel %vm1375, %v1402, %v1323
    %v1405 = vsel %vm1378, %v1403, %v1309
    %v1406 = vsel %vm1378, %v1404, %v1313
    %v1407 = vsel %vm1381, %v1405, %v1299
    %v1408 = vsel %vm1381, %v1406, %v1303
    %v1409 = vsel %vm1384, %v1407, %v1390
    %v1410 = vsel %vm1384, %v1408, %v1394
    %vm1411 = vcmp.lt.s32.totalorder %v161, 32
    %1414 = vrot.lane.b32.xlu0 %v1385, 64
    %v1415 = vpop.permute.xlu0 %1414
    %1416 = vrot.lane.b32.xlu0 %v1386, 64
    %v1417 = vpop.permute.xlu0 %1416
    %1422 = vrot.lane.b32.xlu0 %v1409, 64
    %v1423 = vpop.permute.xlu0 %1422
    %1424 = vrot.lane.b32.xlu0 %v1410, 64
    %v1425 = vpop.permute.xlu0 %1424
    %v1428 = vsel %vm1411, %v1415, %v1423
    %v1429 = vsel %vm1411, %v1417, %v1425
    %1430 = vst.msk [vmem:[%s4] sm:$0xff] %vm232, %v1428
    %1431 = vst.msk [vmem:[%s4 + $0x8] sm:$0xff] %vm232, %v1429
    // Predicated region
    $region30: #{self_attn_series_lstm_forward.2} parent=1 // pred_check
      _
    $region31: #{self_attn_series_lstm_forward.2} parent=1 // pred_check_branch
      %1433 = sbr.rel (0) target = $region33
    $region32: #{self_attn_series_lstm_forward.2} parent=1 // pred_region
      _
    $region33: #{self_attn_series_lstm_forward.2} parent=1 // pred_fallthru
      _
    // Predicated region
    $region34: #{self_attn_series_lstm_forward.2} parent=1 // pred_check
      _
    $region35: #{self_attn_series_lstm_forward.2} parent=1 // pred_check_branch
      %1435 = sbr.rel (0) target = $region37
    $region36: #{self_attn_series_lstm_forward.2} parent=1 // pred_region
      _
    $region37: #{self_attn_series_lstm_forward.2} parent=1 // pred_fallthru
      _
    %1436 = vsyncpa [#allocation3], 1
    %1437 = vsyncpa [#allocation5], 1

</llo_original>
